<compile_context>
chip_gen: v6e
topology: v6e:2x2x1
jax: 0.10.0
libtpu: 0.0.40
codegen_flags: <defaults>
</compile_context>

<pallas_src>
import functools

import jax
import jax.numpy as jnp
from jax.experimental import pallas as pl
from jax.experimental.pallas import tpu as pltpu


def _round_up(a, m):
    return (a + m - 1) // m * m


def _cdiv(a, b):
    return (a + b - 1) // b


def _softplus(x):
    return jnp.logaddexp(x, 0.0)


def prodlda_kernel(training, t_pad, *refs):
    if training:
        (x_ref, eps_ref,
         w1_ref, b1_ref, w2_ref, b2_ref,
         whead_ref, bhead_ref, wdec_ref, bdec_ref,
         head_ref, rec_ref) = refs
    else:
        (x_ref,
         w1_ref, b1_ref, w2_ref, b2_ref,
         whead_ref, bhead_ref, wdec_ref, bdec_ref,
         head_ref, rec_ref) = refs
        eps_ref = None

    # ---- encoder (x already bf16; f32 accumulation) ----
    h = _softplus(jnp.dot(x_ref[...], w1_ref[...],
                          preferred_element_type=jnp.float32) + b1_ref[...])
    h = _softplus(jnp.dot(h.astype(jnp.bfloat16), w2_ref[...],
                          preferred_element_type=jnp.float32) + b2_ref[...])
    # TODO(synk): nn.Dropout is identity here (eval-mode dropout); stochastic
    # dropout masks are not applied inside the kernel.

    # ---- fused, lane-aligned inference heads ----
    # whead columns [0:t_pad) -> mu (BN folded, zero-padded past T)
    #               [t_pad:2*t_pad) -> logvar (BN folded, zero-padded past T)
    head = jnp.dot(h.astype(jnp.bfloat16), whead_ref[...],
                   preferred_element_type=jnp.float32) + bhead_ref[...]
    mu = head[:, :t_pad]
    sigma = jnp.exp(0.5 * head[:, t_pad:])      # exp only on the logvar half
    head_ref[:, :t_pad] = mu
    head_ref[:, t_pad:] = sigma

    # ---- LogNormal posterior sample / mean ----
    if training:
        sampled = jnp.exp(mu + sigma * eps_ref[...])       # rsample
    else:
        sampled = jnp.exp(mu + 0.5 * sigma * sigma)        # mean

    # ---- decoder (BN folded; zero rows for the topic padding) + softmax ----
    dec = jnp.dot(sampled.astype(jnp.bfloat16), wdec_ref[...],
                  preferred_element_type=jnp.float32) + bdec_ref[...]
    m = jnp.max(dec, axis=1, keepdims=True)
    e = jnp.exp(dec - m)
    inv = 1.0 / jnp.sum(e, axis=1, keepdims=True)   # exact -> rows sum to 1
    rec_ref[...] = (e * inv).astype(rec_ref.dtype)


def _hw_hints(batch):
    """Generation-aware defaults: (vmem_cap_bytes, default_block_rows, num_tc)."""
    vmem = None
    kind = ""
    try:
        vmem = int(pltpu.get_tpu_info().vmem_capacity_bytes)
    except Exception:
        vmem = None
    try:
        kind = jax.devices()[0].device_kind.lower()
    except Exception:
        kind = ""
    is_v7x = ("7" in kind) or (vmem is not None and vmem <= (64 << 20))
    is_v5e = ("v5" in kind) and (("lite" in kind) or ("v5e" in kind))
    if is_v7x:
        # 64 MiB physical VMEM, 2 TensorCores: leave headroom, shard the grid.
        return 48 << 20, 256, 2
    if is_v5e:
        # Lower HBM BW / single vector-store slot: smaller batch tiles.
        return 100 << 20, 128, 1
    # v6e / unknown: 128 MiB VMEM; larger tiles amortize per-step overhead.
    return 100 << 20, (512 if batch >= 2048 else 256), 1


def prodlda_forward(prepared, x, eps=None, training=False, block_rows=None,
                    rec_dtype=jnp.float32):
    """prepared: dict from prepare_params(). x: (B, V) f32 counts. eps: (B, T) f32.
    rec_dtype: pass jnp.bfloat16 (e.g. on v5e) to halve the (B, V) writeback."""
    B, V = x.shape
    H = prepared["w1"].shape[1]
    T = int(prepared["num_topics"])
    Tp = int(prepared["num_topics_padded"])

    if training and eps is None:
        raise ValueError("eps is required when training=True")

    vmem_cap, default_tb, num_tc = _hw_hints(B)
    TB = block_rows if block_rows is not None else default_tb
    # bf16 LHS packs 16 sublanes per vreg / MXU tile -> TB multiple of 16.
    TB = max(16, _round_up(min(TB, _round_up(B, 16)), 16))
    # v7x: guarantee >=2 batch tiles so the "parallel" axis feeds both TCs.
    if num_tc > 1 and B >= num_tc * 16:
        TB = min(TB, _round_up(_cdiv(B, num_tc), 16))

    weight_args = (prepared["w1"], prepared["b1"],
                   prepared["w2"], prepared["b2"],
                   prepared["whead"], prepared["bhead"],
                   prepared["wdec"], prepared["bdec"])
    weight_bytes = sum(int(a.size) * a.dtype.itemsize for a in weight_args)
    rec_bytes = jnp.dtype(rec_dtype).itemsize

    def tile_io_bytes(tb):
        b = tb * V * 2                  # x tile (bf16)
        b += tb * 2 * Tp * 4            # head out (f32)
        b += tb * V * rec_bytes         # rec out
        if training:
            b += tb * Tp * 4            # eps tile (f32)
        return b

    # Shrink TB until single-buffered weights + double-buffered tile I/O fit.
    while TB > 16 and weight_bytes + 2 * tile_io_bytes(TB) + (8 << 20) > vmem_cap:
        TB = max(16, _round_up(TB // 2, 16))

    B_pad = _round_up(B, TB)
    grid = (B_pad // TB,)

    # Stream x as bf16 (exactly what the kernel would cast to anyway): halves
    # the dominant HBM read. NOTE: counts > 256 are rounded by the bf16 cast.
    x = x.astype(jnp.bfloat16)
    if B_pad != B:
        x = jnp.pad(x, ((0, B_pad - B), (0, 0)))
    if training:
        eps = jnp.pad(eps, ((0, B_pad - B), (0, Tp - T)))  # lane-pad to Tp

    def row_spec(cols):
        return pl.BlockSpec((TB, cols), lambda i: (i, 0))

    out_shape = (jax.ShapeDtypeStruct((B_pad, 2 * Tp), jnp.float32),  # [mu|sigma]
                 jax.ShapeDtypeStruct((B_pad, V), rec_dtype))         # rec
    out_specs = (row_spec(2 * Tp), row_spec(V))

    args = ((x, eps) + weight_args) if training else ((x,) + weight_args)

    # Advisory cost estimate: weights fetched once (constant index_map),
    # x/eps/outputs stream per batch tile.
    flops = 2 * B_pad * (V * H + H * H + H * 2 * Tp + Tp * V)
    transcendentals = B_pad * (4 * H + 2 * Tp + V)
    bytes_accessed = (B_pad * V * 2 + weight_bytes
                      + B_pad * 2 * Tp * 4 + B_pad * V * rec_bytes)
    if training:
        bytes_accessed += B_pad * Tp * 4

    vmem_limit = int(min(max(weight_bytes + 2 * tile_io_bytes(TB) + (8 << 20),
                             32 << 20), vmem_cap))

    def build(single_buffer_weights):
        def resident(arr):
            if single_buffer_weights:
                # Constant index_map -> single buffer suffices; halves the
                # resident-weight VMEM footprint.
                return pl.BlockSpec(arr.shape, lambda i: (0, 0),
                                    pipeline_mode=pl.Buffered(1))
            return pl.BlockSpec(arr.shape, lambda i: (0, 0))

        weight_specs = [resident(a) for a in weight_args]
        if training:
            in_specs = [row_spec(V), row_spec(Tp)] + weight_specs
        else:
            in_specs = [row_spec(V)] + weight_specs

        return pl.pallas_call(
            functools.partial(prodlda_kernel, training, Tp),
            grid_spec=pltpu.PrefetchScalarGridSpec(
                num_scalar_prefetch=0,
                grid=grid,
                in_specs=in_specs,
                out_specs=out_specs,
            ),
            out_shape=out_shape,
            compiler_params=pltpu.CompilerParams(
                dimension_semantics=("parallel",),
                vmem_limit_bytes=vmem_limit,
            ),
            cost_estimate=pl.CostEstimate(
                flops=int(flops),
                transcendentals=int(transcendentals),
                bytes_accessed=int(bytes_accessed),
            ),
        )

    try:
        head, rec = build(True)(*args)
    except Exception:
        # pl.Buffered(1) not supported by this jax version / interpret mode:
        # fall back to default (double-buffered) weight specs.
        head, rec = build(False)(*args)

    mu = head[:B, :T]
    sigma = head[:B, Tp:Tp + T]
    return (mu, sigma), rec[:B]


def init_params(key, vocab_size, hidden_size, num_topics, bn_eps=1e-5):
    """Raw (torch-layout-equivalent) parameters; Linear weights stored (in, out)."""
    ks = list(jax.random.split(key, 8))

    def linear(k, fin, fout):
        kw, kb = jax.random.split(k)
        bound = 1.0 / float(fin) ** 0.5
        w = jax.random.uniform(kw, (fin, fout), jnp.float32, -bound, bound)
        b = jax.random.uniform(kb, (1, fout), jnp.float32, -bound, bound)
        return w, b

    def batchnorm(k, dim):
        k1, k2, k3, k4 = jax.random.split(k, 4)
        weight = jax.random.uniform(k1, (1, dim), jnp.float32, 0.5, 1.5)
        bias = jax.random.uniform(k2, (1, dim), jnp.float32, -0.5, 0.5)
        rmean = jax.random.uniform(k3, (1, dim), jnp.float32, -0.1, 0.1)
        rvar = jax.random.uniform(k4, (1, dim), jnp.float32, 0.5, 1.5)
        scale = weight / jnp.sqrt(rvar + bn_eps)
        shift = bias - rmean * scale
        return scale, shift

    p = {}
    p["w1"], p["b1"] = linear(ks[0], vocab_size, hidden_size)
    p["w2"], p["b2"] = linear(ks[1], hidden_size, hidden_size)
    p["wmu"], p["bmu"] = linear(ks[2], hidden_size, num_topics)
    p["wstd"], p["bstd"] = linear(ks[3], hidden_size, num_topics)
    p["bnmu_scale"], p["bnmu_shift"] = batchnorm(ks[4], num_topics)
    p["bnstd_scale"], p["bnstd_shift"] = batchnorm(ks[5], num_topics)
    p["wdec"], p["bdec"] = linear(ks[6], num_topics, vocab_size)
    p["bndec_scale"], p["bndec_shift"] = batchnorm(ks[7], vocab_size)
    return p


def prepare_params(raw, matmul_dtype=jnp.bfloat16):
    """Host-side prep: fold eval-mode BatchNorm into weights/biases, fuse and
    lane-pad the mu/std heads into one (H, 2*Tp) matrix (Tp = round_up(T, 128)),
    zero-pad the decoder contraction dim to Tp, and cast matmul weights bf16."""
    T = raw["wmu"].shape[1]
    Tp = _round_up(T, 128)

    def pad_cols(a, width):
        return jnp.pad(a, ((0, 0), (0, width - a.shape[1])))

    wmu = raw["wmu"] * raw["bnmu_scale"]
    bmu = raw["bmu"] * raw["bnmu_scale"] + raw["bnmu_shift"]
    wstd = raw["wstd"] * raw["bnstd_scale"]
    bstd = raw["bstd"] * raw["bnstd_scale"] + raw["bnstd_shift"]
    whead = jnp.concatenate([pad_cols(wmu, Tp), pad_cols(wstd, Tp)], axis=1)
    bhead = jnp.concatenate([pad_cols(bmu, Tp), pad_cols(bstd, Tp)], axis=1)

    wdec = raw["wdec"] * raw["bndec_scale"]               # (T, V)
    wdec = jnp.pad(wdec, ((0, Tp - T), (0, 0)))           # zero rows: padding
    bdec = raw["bdec"] * raw["bndec_scale"] + raw["bndec_shift"]
    return {
        "w1": raw["w1"].astype(matmul_dtype), "b1": raw["b1"],
        "w2": raw["w2"].astype(matmul_dtype), "b2": raw["b2"],
        "whead": whead.astype(matmul_dtype), "bhead": bhead,
        "wdec": wdec.astype(matmul_dtype), "bdec": bdec,
        "num_topics": T, "num_topics_padded": Tp,
    }


def _reference_forward_prepared(p, x, eps, training=False):
    """Pure-JAX reference using the SAME folded/padded params & precision."""
    bf = jnp.bfloat16
    T, Tp = p["num_topics"], p["num_topics_padded"]
    h = _softplus(jnp.dot(x.astype(bf), p["w1"],
                          preferred_element_type=jnp.float32) + p["b1"])
    h = _softplus(jnp.dot(h.astype(bf), p["w2"],
                          preferred_element_type=jnp.float32) + p["b2"])
    head = jnp.dot(h.astype(bf), p["whead"],
                   preferred_element_type=jnp.float32) + p["bhead"]
    mu, logvar = head[:, :Tp], head[:, Tp:]
    sigma = jnp.exp(0.5 * logvar)
    if training:
        eps_p = jnp.pad(eps, ((0, 0), (0, Tp - T)))
        sampled = jnp.exp(mu + sigma * eps_p)
    else:
        sampled = jnp.exp(mu + 0.5 * sigma * sigma)
    dec = jnp.dot(sampled.astype(bf), p["wdec"],
                  preferred_element_type=jnp.float32) + p["bdec"]
    rec = jax.nn.softmax(dec, axis=1)
    return (mu[:, :T], sigma[:, :T]), rec


def _reference_forward_full(p, x, eps, training=False):
    """Full-f32, un-folded reference (original module semantics)."""
    h = _softplus(x @ p["w1"] + p["b1"])
    h = _softplus(h @ p["w2"] + p["b2"])
    mu = (h @ p["wmu"] + p["bmu"]) * p["bnmu_scale"] + p["bnmu_shift"]
    logvar = (h @ p["wstd"] + p["bstd"]) * p["bnstd_scale"] + p["bnstd_shift"]
    sigma = jnp.exp(0.5 * logvar)
    sampled = jnp.exp(mu + sigma * eps) if training else jnp.exp(mu + 0.5 * sigma * sigma)
    dec = (sampled @ p["wdec"] + p["bdec"]) * p["bndec_scale"] + p["bndec_shift"]
    rec = jax.nn.softmax(dec, axis=1)
    return (mu, sigma), rec


if __name__ == "__main__":
    vocab_size, hidden_size, num_topics, batch = 256, 128, 64, 8

    key = jax.random.PRNGKey(0)
    k_params, k_x, k_eps = jax.random.split(key, 3)

    raw = init_params(k_params, vocab_size, hidden_size, num_topics)
    prepared = prepare_params(raw)

    # bag-of-words style non-negative counts
    x = jax.random.uniform(k_x, (batch, vocab_size), jnp.float32, 0.0, 3.0)
    eps = jax.random.normal(k_eps, (batch, num_topics), jnp.float32)

    # ---- eval path (posterior mean) ----
    (mu, sigma), rec = prodlda_forward(prepared, x, training=False)
    jax.block_until_ready(rec)

    (mu_r, sigma_r), rec_r = _reference_forward_prepared(prepared, x, eps, training=False)
    assert jnp.allclose(mu, mu_r, atol=1e-3, rtol=1e-3)
    assert jnp.allclose(sigma, sigma_r, atol=1e-3, rtol=1e-3)
    assert jnp.allclose(rec, rec_r, atol=1e-3, rtol=1e-2)
    assert jnp.allclose(jnp.sum(rec, axis=1), 1.0, atol=1e-3)

    # Loose semantic check vs original f32 / un-folded math (bf16 matmuls
    # perturb values slightly).
    (mu_f, sigma_f), _ = _reference_forward_full(raw, x, eps, training=False)
    assert jnp.allclose(mu, mu_f, atol=0.1, rtol=0.1)
    assert jnp.allclose(sigma, sigma_f, atol=0.1, rtol=0.1)

    # ---- training path (LogNormal rsample; dropout treated as identity) ----
    (mu_t, sigma_t), rec_t = prodlda_forward(prepared, x, eps, training=True)
    jax.block_until_ready(rec_t)
    (_, _), rec_tr = _reference_forward_prepared(prepared, x, eps, training=True)
    assert jnp.allclose(rec_t, rec_tr, atol=1e-3, rtol=1e-2)
    assert jnp.allclose(jnp.sum(rec_t, axis=1), 1.0, atol=1e-3)

    assert mu.shape == (batch, num_topics)
    assert sigma.shape == (batch, num_topics)
    assert rec.shape == (batch, vocab_size)

    print("KERNEL_OK")
</pallas_src>

<mosaic_0001>
module attributes {stable_mosaic.version = 11 : i64} {
  func.func @prodlda_kernel(%arg0: i32, %arg1: memref<16x256xbf16, #tpu.memory_space<vmem>>, %arg2: memref<256x128xbf16, #tpu.memory_space<vmem>>, %arg3: memref<1x128xf32, #tpu.memory_space<vmem>>, %arg4: memref<128x128xbf16, #tpu.memory_space<vmem>>, %arg5: memref<1x128xf32, #tpu.memory_space<vmem>>, %arg6: memref<128x256xbf16, #tpu.memory_space<vmem>>, %arg7: memref<1x256xf32, #tpu.memory_space<vmem>>, %arg8: memref<128x256xbf16, #tpu.memory_space<vmem>>, %arg9: memref<1x256xf32, #tpu.memory_space<vmem>>, %arg10: memref<16x256xf32, #tpu.memory_space<vmem>>, %arg11: memref<16x256xf32, #tpu.memory_space<vmem>>) attributes {dimension_semantics = [#tpu.dimension_semantics<parallel>], iteration_bounds = array<i64: 1>, scalar_prefetch = 0 : i64, scratch_operands = 0 : i64, tpu.core_type = #tpu.core_type<tc>, window_params = [{transform_indices = @transform_0, window_bounds = array<i64: 16, 256>}, {pipeline_mode = #tpu.pipeline_mode<synchronous>, transform_indices = @transform_1, window_bounds = array<i64: 256, 128>}, {pipeline_mode = #tpu.pipeline_mode<synchronous>, transform_indices = @transform_2, window_bounds = array<i64: 1, 128>}, {pipeline_mode = #tpu.pipeline_mode<synchronous>, transform_indices = @transform_3, window_bounds = array<i64: 128, 128>}, {pipeline_mode = #tpu.pipeline_mode<synchronous>, transform_indices = @transform_4, window_bounds = array<i64: 1, 128>}, {pipeline_mode = #tpu.pipeline_mode<synchronous>, transform_indices = @transform_5, window_bounds = array<i64: 128, 256>}, {pipeline_mode = #tpu.pipeline_mode<synchronous>, transform_indices = @transform_6, window_bounds = array<i64: 1, 256>}, {pipeline_mode = #tpu.pipeline_mode<synchronous>, transform_indices = @transform_7, window_bounds = array<i64: 128, 256>}, {pipeline_mode = #tpu.pipeline_mode<synchronous>, transform_indices = @transform_8, window_bounds = array<i64: 1, 256>}, {transform_indices = @transform_9, window_bounds = array<i64: 16, 256>}, {transform_indices = @transform_10, window_bounds = array<i64: 16, 256>}]} {
    %c0 = arith.constant 0 : index
    %c0_0 = arith.constant 0 : index
    %0 = vector.load %arg1[%c0, %c0_0] : memref<16x256xbf16, #tpu.memory_space<vmem>>, vector<16x256xbf16>
    %c0_1 = arith.constant 0 : index
    %c0_2 = arith.constant 0 : index
    %1 = vector.load %arg2[%c0_1, %c0_2] : memref<256x128xbf16, #tpu.memory_space<vmem>>, vector<256x128xbf16>
    %cst = arith.constant dense<0.000000e+00> : vector<16x128xf32>
    %2 = tpu.matmul %0, %1, %cst {dimension_numbers = #tpu.dot_dimension_numbers<[1], [0], [0], [1], [0, 0, 1, 1], [], []>} : vector<16x256xbf16>, vector<256x128xbf16>, vector<16x128xf32> -> vector<16x128xf32>
    %c0_3 = arith.constant 0 : index
    %c0_4 = arith.constant 0 : index
    %3 = vector.load %arg3[%c0_3, %c0_4] : memref<1x128xf32, #tpu.memory_space<vmem>>, vector<1x128xf32>
    %4 = vector.broadcast %3 : vector<1x128xf32> to vector<16x128xf32>
    %5 = arith.addf %2, %4 : vector<16x128xf32>
    %cst_5 = arith.constant 0.000000e+00 : f32
    %6 = vector.broadcast %cst_5 : f32 to vector<16x128xf32>
    %7 = arith.maximumf %5, %6 : vector<16x128xf32>
    %8 = vector.broadcast %cst_5 : f32 to vector<16x128xf32>
    %9 = arith.subf %5, %8 : vector<16x128xf32>
    %10 = arith.cmpf one, %9, %9 : vector<16x128xf32>
    %11 = vector.broadcast %cst_5 : f32 to vector<16x128xf32>
    %12 = arith.addf %5, %11 : vector<16x128xf32>
    %13 = math.absf %9 : vector<16x128xf32>
    %cst_6 = arith.constant 0.000000e+00 : f32
    %14 = vector.broadcast %cst_6 : f32 to vector<16x128xf32>
    %15 = arith.subf %14, %13 : vector<16x128xf32>
    %16 = math.exp %15 : vector<16x128xf32>
    %17 = math.log1p %16 : vector<16x128xf32>
    %18 = arith.addf %7, %17 : vector<16x128xf32>
    %19 = arith.select %10, %12, %18 : vector<16x128xi1>, vector<16x128xf32>
    %20 = arith.truncf %19 : vector<16x128xf32> to vector<16x128xbf16>
    %c0_7 = arith.constant 0 : index
    %c0_8 = arith.constant 0 : index
    %21 = vector.load %arg4[%c0_7, %c0_8] : memref<128x128xbf16, #tpu.memory_space<vmem>>, vector<128x128xbf16>
    %cst_9 = arith.constant dense<0.000000e+00> : vector<16x128xf32>
    %22 = tpu.matmul %20, %21, %cst_9 {dimension_numbers = #tpu.dot_dimension_numbers<[1], [0], [0], [1], [0, 0, 1, 1], [], []>} : vector<16x128xbf16>, vector<128x128xbf16>, vector<16x128xf32> -> vector<16x128xf32>
    %c0_10 = arith.constant 0 : index
    %c0_11 = arith.constant 0 : index
    %23 = vector.load %arg5[%c0_10, %c0_11] : memref<1x128xf32, #tpu.memory_space<vmem>>, vector<1x128xf32>
    %24 = vector.broadcast %23 : vector<1x128xf32> to vector<16x128xf32>
    %25 = arith.addf %22, %24 : vector<16x128xf32>
    %cst_12 = arith.constant 0.000000e+00 : f32
    %26 = vector.broadcast %cst_12 : f32 to vector<16x128xf32>
    %27 = arith.maximumf %25, %26 : vector<16x128xf32>
    %28 = vector.broadcast %cst_12 : f32 to vector<16x128xf32>
    %29 = arith.subf %25, %28 : vector<16x128xf32>
    %30 = arith.cmpf one, %29, %29 : vector<16x128xf32>
    %31 = vector.broadcast %cst_12 : f32 to vector<16x128xf32>
    %32 = arith.addf %25, %31 : vector<16x128xf32>
    %33 = math.absf %29 : vector<16x128xf32>
    %cst_13 = arith.constant 0.000000e+00 : f32
    %34 = vector.broadcast %cst_13 : f32 to vector<16x128xf32>
    %35 = arith.subf %34, %33 : vector<16x128xf32>
    %36 = math.exp %35 : vector<16x128xf32>
    %37 = math.log1p %36 : vector<16x128xf32>
    %38 = arith.addf %27, %37 : vector<16x128xf32>
    %39 = arith.select %30, %32, %38 : vector<16x128xi1>, vector<16x128xf32>
    %40 = arith.truncf %39 : vector<16x128xf32> to vector<16x128xbf16>
    %c0_14 = arith.constant 0 : index
    %c0_15 = arith.constant 0 : index
    %41 = vector.load %arg6[%c0_14, %c0_15] : memref<128x256xbf16, #tpu.memory_space<vmem>>, vector<128x256xbf16>
    %cst_16 = arith.constant dense<0.000000e+00> : vector<16x256xf32>
    %42 = tpu.matmul %40, %41, %cst_16 {dimension_numbers = #tpu.dot_dimension_numbers<[1], [0], [0], [1], [0, 0, 1, 1], [], []>} : vector<16x128xbf16>, vector<128x256xbf16>, vector<16x256xf32> -> vector<16x256xf32>
    %c0_17 = arith.constant 0 : index
    %c0_18 = arith.constant 0 : index
    %43 = vector.load %arg7[%c0_17, %c0_18] : memref<1x256xf32, #tpu.memory_space<vmem>>, vector<1x256xf32>
    %44 = vector.broadcast %43 : vector<1x256xf32> to vector<16x256xf32>
    %45 = arith.addf %42, %44 : vector<16x256xf32>
    %46 = vector.extract_strided_slice %45 {offsets = [0, 0], sizes = [16, 128], strides = [1, 1]} : vector<16x256xf32> to vector<16x128xf32>
    %47 = vector.extract_strided_slice %45 {offsets = [0, 128], sizes = [16, 128], strides = [1, 1]} : vector<16x256xf32> to vector<16x128xf32>
    %cst_19 = arith.constant 5.000000e-01 : f32
    %48 = vector.broadcast %cst_19 : f32 to vector<16x128xf32>
    %49 = arith.mulf %48, %47 : vector<16x128xf32>
    %50 = math.exp %49 : vector<16x128xf32>
    %c0_20 = arith.constant 0 : index
    %c0_21 = arith.constant 0 : index
    %51 = vector.load %arg10[%c0_20, %c0_21] : memref<16x256xf32, #tpu.memory_space<vmem>>, vector<16x128xf32>
    tpu.vector_store %arg10[%c0_20, %c0_21], %46 {strides = array<i32>} : memref<16x256xf32, #tpu.memory_space<vmem>>, vector<16x128xf32>,
    %c0_22 = arith.constant 0 : index
    %c128 = arith.constant 128 : index
    %52 = vector.load %arg10[%c0_22, %c128] : memref<16x256xf32, #tpu.memory_space<vmem>>, vector<16x128xf32>
    tpu.vector_store %arg10[%c0_22, %c128], %50 {strides = array<i32>} : memref<16x256xf32, #tpu.memory_space<vmem>>, vector<16x128xf32>,
    %cst_23 = arith.constant 5.000000e-01 : f32
    %53 = vector.broadcast %cst_23 : f32 to vector<16x128xf32>
    %54 = arith.mulf %53, %50 : vector<16x128xf32>
    %55 = arith.mulf %54, %50 : vector<16x128xf32>
    %56 = arith.addf %46, %55 : vector<16x128xf32>
    %57 = math.exp %56 : vector<16x128xf32>
    %58 = arith.truncf %57 : vector<16x128xf32> to vector<16x128xbf16>
    %c0_24 = arith.constant 0 : index
    %c0_25 = arith.constant 0 : index
    %59 = vector.load %arg8[%c0_24, %c0_25] : memref<128x256xbf16, #tpu.memory_space<vmem>>, vector<128x256xbf16>
    %cst_26 = arith.constant dense<0.000000e+00> : vector<16x256xf32>
    %60 = tpu.matmul %58, %59, %cst_26 {dimension_numbers = #tpu.dot_dimension_numbers<[1], [0], [0], [1], [0, 0, 1, 1], [], []>} : vector<16x128xbf16>, vector<128x256xbf16>, vector<16x256xf32> -> vector<16x256xf32>
    %c0_27 = arith.constant 0 : index
    %c0_28 = arith.constant 0 : index
    %61 = vector.load %arg9[%c0_27, %c0_28] : memref<1x256xf32, #tpu.memory_space<vmem>>, vector<1x256xf32>
    %62 = vector.broadcast %61 : vector<1x256xf32> to vector<16x256xf32>
    %63 = arith.addf %60, %62 : vector<16x256xf32>
    %cst_29 = arith.constant dense<0xFF800000> : vector<16xf32>
    %64 = vector.multi_reduction <maximumf>, %63, %cst_29 [1] : vector<16x256xf32> to vector<16xf32>
    %65 = vector.shape_cast %64 : vector<16xf32> to vector<16x1xf32>
    %66 = vector.broadcast %65 : vector<16x1xf32> to vector<16x256xf32>
    %67 = arith.subf %63, %66 : vector<16x256xf32>
    %68 = math.exp %67 : vector<16x256xf32>
    %cst_30 = arith.constant dense<0.000000e+00> : vector<16xf32>
    %69 = vector.multi_reduction <add>, %68, %cst_30 [1] : vector<16x256xf32> to vector<16xf32>
    %70 = vector.shape_cast %69 : vector<16xf32> to vector<16x1xf32>
    %cst_31 = arith.constant 1.000000e+00 : f32
    %71 = vector.broadcast %cst_31 : f32 to vector<16x1xf32>
    %72 = arith.divf %71, %70 : vector<16x1xf32>
    %73 = vector.broadcast %72 : vector<16x1xf32> to vector<16x256xf32>
    %74 = arith.mulf %68, %73 : vector<16x256xf32>
    %c0_32 = arith.constant 0 : index
    %c0_33 = arith.constant 0 : index
    %75 = vector.load %arg11[%c0_32, %c0_33] : memref<16x256xf32, #tpu.memory_space<vmem>>, vector<16x256xf32>
    tpu.vector_store %arg11[%c0_32, %c0_33], %74 {strides = array<i32>} : memref<16x256xf32, #tpu.memory_space<vmem>>, vector<16x256xf32>,
    return
  }
  func.func @transform_0(%arg0: i32) -> (i32, i32) {
    %c0_i32 = arith.constant 0 : i32
    %c0_i32_0 = arith.constant 0 : i32
    return %arg0, %c0_i32 : i32, i32
  }
  func.func @transform_1(%arg0: i32) -> (i32, i32) {
    %c0_i32 = arith.constant 0 : i32
    %c0_i32_0 = arith.constant 0 : i32
    %c0_i32_1 = arith.constant 0 : i32
    return %c0_i32, %c0_i32_0 : i32, i32
  }
  func.func @transform_2(%arg0: i32) -> (i32, i32) {
    %c0_i32 = arith.constant 0 : i32
    %c0_i32_0 = arith.constant 0 : i32
    %c0_i32_1 = arith.constant 0 : i32
    return %c0_i32, %c0_i32_0 : i32, i32
  }
  func.func @transform_3(%arg0: i32) -> (i32, i32) {
    %c0_i32 = arith.constant 0 : i32
    %c0_i32_0 = arith.constant 0 : i32
    %c0_i32_1 = arith.constant 0 : i32
    return %c0_i32, %c0_i32_0 : i32, i32
  }
  func.func @transform_4(%arg0: i32) -> (i32, i32) {
    %c0_i32 = arith.constant 0 : i32
    %c0_i32_0 = arith.constant 0 : i32
    %c0_i32_1 = arith.constant 0 : i32
    return %c0_i32, %c0_i32_0 : i32, i32
  }
  func.func @transform_5(%arg0: i32) -> (i32, i32) {
    %c0_i32 = arith.constant 0 : i32
    %c0_i32_0 = arith.constant 0 : i32
    %c0_i32_1 = arith.constant 0 : i32
    return %c0_i32, %c0_i32_0 : i32, i32
  }
  func.func @transform_6(%arg0: i32) -> (i32, i32) {
    %c0_i32 = arith.constant 0 : i32
    %c0_i32_0 = arith.constant 0 : i32
    %c0_i32_1 = arith.constant 0 : i32
    return %c0_i32, %c0_i32_0 : i32, i32
  }
  func.func @transform_7(%arg0: i32) -> (i32, i32) {
    %c0_i32 = arith.constant 0 : i32
    %c0_i32_0 = arith.constant 0 : i32
    %c0_i32_1 = arith.constant 0 : i32
    return %c0_i32, %c0_i32_0 : i32, i32
  }
  func.func @transform_8(%arg0: i32) -> (i32, i32) {
    %c0_i32 = arith.constant 0 : i32
    %c0_i32_0 = arith.constant 0 : i32
    %c0_i32_1 = arith.constant 0 : i32
    return %c0_i32, %c0_i32_0 : i32, i32
  }
  func.func @transform_9(%arg0: i32) -> (i32, i32) {
    %c0_i32 = arith.constant 0 : i32
    %c0_i32_0 = arith.constant 0 : i32
    return %arg0, %c0_i32 : i32, i32
  }
  func.func @transform_10(%arg0: i32) -> (i32, i32) {
    %c0_i32 = arith.constant 0 : i32
    %c0_i32_0 = arith.constant 0 : i32
    return %arg0, %c0_i32 : i32, i32
  }
}

module attributes {stable_mosaic.version = 11 : i64} {
  func.func @prodlda_kernel(%arg0: i32, %arg1: memref<16x256xbf16, #tpu.memory_space<vmem>>, %arg2: memref<256x128xbf16, #tpu.memory_space<vmem>>, %arg3: memref<1x128xf32, #tpu.memory_space<vmem>>, %arg4: memref<128x128xbf16, #tpu.memory_space<vmem>>, %arg5: memref<1x128xf32, #tpu.memory_space<vmem>>, %arg6: memref<128x256xbf16, #tpu.memory_space<vmem>>, %arg7: memref<1x256xf32, #tpu.memory_space<vmem>>, %arg8: memref<128x256xbf16, #tpu.memory_space<vmem>>, %arg9: memref<1x256xf32, #tpu.memory_space<vmem>>, %arg10: memref<16x256xf32, #tpu.memory_space<vmem>>, %arg11: memref<16x256xf32, #tpu.memory_space<vmem>>) attributes {dimension_semantics = [#tpu.dimension_semantics<parallel>], iteration_bounds = array<i64: 1>, scalar_prefetch = 0 : i64, scratch_operands = 0 : i64, tpu.core_type = #tpu.core_type<tc>, window_params = [{transform_indices = @transform_0, window_bounds = array<i64: 16, 256>}, {pipeline_mode = #tpu.pipeline_mode<synchronous>, transform_indices = @transform_1, window_bounds = array<i64: 256, 128>}, {pipeline_mode = #tpu.pipeline_mode<synchronous>, transform_indices = @transform_2, window_bounds = array<i64: 1, 128>}, {pipeline_mode = #tpu.pipeline_mode<synchronous>, transform_indices = @transform_3, window_bounds = array<i64: 128, 128>}, {pipeline_mode = #tpu.pipeline_mode<synchronous>, transform_indices = @transform_4, window_bounds = array<i64: 1, 128>}, {pipeline_mode = #tpu.pipeline_mode<synchronous>, transform_indices = @transform_5, window_bounds = array<i64: 128, 256>}, {pipeline_mode = #tpu.pipeline_mode<synchronous>, transform_indices = @transform_6, window_bounds = array<i64: 1, 256>}, {pipeline_mode = #tpu.pipeline_mode<synchronous>, transform_indices = @transform_7, window_bounds = array<i64: 128, 256>}, {pipeline_mode = #tpu.pipeline_mode<synchronous>, transform_indices = @transform_8, window_bounds = array<i64: 1, 256>}, {transform_indices = @transform_9, window_bounds = array<i64: 16, 256>}, {transform_indices = @transform_10, window_bounds = array<i64: 16, 256>}]} {
    %c0 = arith.constant 0 : index
    %c0_0 = arith.constant 0 : index
    %0 = vector.load %arg1[%c0, %c0_0] : memref<16x256xbf16, #tpu.memory_space<vmem>>, vector<16x256xbf16>
    %c0_1 = arith.constant 0 : index
    %c0_2 = arith.constant 0 : index
    %1 = vector.load %arg2[%c0_1, %c0_2] : memref<256x128xbf16, #tpu.memory_space<vmem>>, vector<256x128xbf16>
    %cst = arith.constant dense<0.000000e+00> : vector<16x128xf32>
    %2 = tpu.matmul %0, %1, %cst {dimension_numbers = #tpu.dot_dimension_numbers<[1], [0], [0], [1], [0, 0, 1, 1], [], []>} : vector<16x256xbf16>, vector<256x128xbf16>, vector<16x128xf32> -> vector<16x128xf32>
    %c0_3 = arith.constant 0 : index
    %c0_4 = arith.constant 0 : index
    %3 = vector.load %arg3[%c0_3, %c0_4] : memref<1x128xf32, #tpu.memory_space<vmem>>, vector<1x128xf32>
    %4 = vector.broadcast %3 : vector<1x128xf32> to vector<16x128xf32>
    %5 = arith.addf %2, %4 : vector<16x128xf32>
    %cst_5 = arith.constant 0.000000e+00 : f32
    %6 = vector.broadcast %cst_5 : f32 to vector<16x128xf32>
    %7 = arith.maximumf %5, %6 : vector<16x128xf32>
    %8 = vector.broadcast %cst_5 : f32 to vector<16x128xf32>
    %9 = arith.subf %5, %8 : vector<16x128xf32>
    %10 = arith.cmpf one, %9, %9 : vector<16x128xf32>
    %11 = vector.broadcast %cst_5 : f32 to vector<16x128xf32>
    %12 = arith.addf %5, %11 : vector<16x128xf32>
    %13 = math.absf %9 : vector<16x128xf32>
    %cst_6 = arith.constant 0.000000e+00 : f32
    %14 = vector.broadcast %cst_6 : f32 to vector<16x128xf32>
    %15 = arith.subf %14, %13 : vector<16x128xf32>
    %16 = math.exp %15 : vector<16x128xf32>
    %17 = math.log1p %16 : vector<16x128xf32>
    %18 = arith.addf %7, %17 : vector<16x128xf32>
    %19 = arith.select %10, %12, %18 : vector<16x128xi1>, vector<16x128xf32>
    %20 = arith.truncf %19 : vector<16x128xf32> to vector<16x128xbf16>
    %c0_7 = arith.constant 0 : index
    %c0_8 = arith.constant 0 : index
    %21 = vector.load %arg4[%c0_7, %c0_8] : memref<128x128xbf16, #tpu.memory_space<vmem>>, vector<128x128xbf16>
    %cst_9 = arith.constant dense<0.000000e+00> : vector<16x128xf32>
    %22 = tpu.matmul %20, %21, %cst_9 {dimension_numbers = #tpu.dot_dimension_numbers<[1], [0], [0], [1], [0, 0, 1, 1], [], []>} : vector<16x128xbf16>, vector<128x128xbf16>, vector<16x128xf32> -> vector<16x128xf32>
    %c0_10 = arith.constant 0 : index
    %c0_11 = arith.constant 0 : index
    %23 = vector.load %arg5[%c0_10, %c0_11] : memref<1x128xf32, #tpu.memory_space<vmem>>, vector<1x128xf32>
    %24 = vector.broadcast %23 : vector<1x128xf32> to vector<16x128xf32>
    %25 = arith.addf %22, %24 : vector<16x128xf32>
    %cst_12 = arith.constant 0.000000e+00 : f32
    %26 = vector.broadcast %cst_12 : f32 to vector<16x128xf32>
    %27 = arith.maximumf %25, %26 : vector<16x128xf32>
    %28 = vector.broadcast %cst_12 : f32 to vector<16x128xf32>
    %29 = arith.subf %25, %28 : vector<16x128xf32>
    %30 = arith.cmpf one, %29, %29 : vector<16x128xf32>
    %31 = vector.broadcast %cst_12 : f32 to vector<16x128xf32>
    %32 = arith.addf %25, %31 : vector<16x128xf32>
    %33 = math.absf %29 : vector<16x128xf32>
    %cst_13 = arith.constant 0.000000e+00 : f32
    %34 = vector.broadcast %cst_13 : f32 to vector<16x128xf32>
    %35 = arith.subf %34, %33 : vector<16x128xf32>
    %36 = math.exp %35 : vector<16x128xf32>
    %37 = math.log1p %36 : vector<16x128xf32>
    %38 = arith.addf %27, %37 : vector<16x128xf32>
    %39 = arith.select %30, %32, %38 : vector<16x128xi1>, vector<16x128xf32>
    %40 = arith.truncf %39 : vector<16x128xf32> to vector<16x128xbf16>
    %c0_14 = arith.constant 0 : index
    %c0_15 = arith.constant 0 : index
    %41 = vector.load %arg6[%c0_14, %c0_15] : memref<128x256xbf16, #tpu.memory_space<vmem>>, vector<128x256xbf16>
    %cst_16 = arith.constant dense<0.000000e+00> : vector<16x256xf32>
    %42 = tpu.matmul %40, %41, %cst_16 {dimension_numbers = #tpu.dot_dimension_numbers<[1], [0], [0], [1], [0, 0, 1, 1], [], []>} : vector<16x128xbf16>, vector<128x256xbf16>, vector<16x256xf32> -> vector<16x256xf32>
    %c0_17 = arith.constant 0 : index
    %c0_18 = arith.constant 0 : index
    %43 = vector.load %arg7[%c0_17, %c0_18] : memref<1x256xf32, #tpu.memory_space<vmem>>, vector<1x256xf32>
    %44 = vector.broadcast %43 : vector<1x256xf32> to vector<16x256xf32>
    %45 = arith.addf %42, %44 : vector<16x256xf32>
    %46 = vector.extract_strided_slice %45 {offsets = [0, 0], sizes = [16, 128], strides = [1, 1]} : vector<16x256xf32> to vector<16x128xf32>
    %47 = vector.extract_strided_slice %45 {offsets = [0, 128], sizes = [16, 128], strides = [1, 1]} : vector<16x256xf32> to vector<16x128xf32>
    %cst_19 = arith.constant 5.000000e-01 : f32
    %48 = vector.broadcast %cst_19 : f32 to vector<16x128xf32>
    %49 = arith.mulf %48, %47 : vector<16x128xf32>
    %50 = math.exp %49 : vector<16x128xf32>
    %c0_20 = arith.constant 0 : index
    %c0_21 = arith.constant 0 : index
    %51 = vector.load %arg10[%c0_20, %c0_21] : memref<16x256xf32, #tpu.memory_space<vmem>>, vector<16x128xf32>
    tpu.vector_store %arg10[%c0_20, %c0_21], %46 {strides = array<i32>} : memref<16x256xf32, #tpu.memory_space<vmem>>, vector<16x128xf32>,
    %c0_22 = arith.constant 0 : index
    %c128 = arith.constant 128 : index
    %52 = vector.load %arg10[%c0_22, %c128] : memref<16x256xf32, #tpu.memory_space<vmem>>, vector<16x128xf32>
    tpu.vector_store %arg10[%c0_22, %c128], %50 {strides = array<i32>} : memref<16x256xf32, #tpu.memory_space<vmem>>, vector<16x128xf32>,
    %cst_23 = arith.constant 5.000000e-01 : f32
    %53 = vector.broadcast %cst_23 : f32 to vector<16x128xf32>
    %54 = arith.mulf %53, %50 : vector<16x128xf32>
    %55 = arith.mulf %54, %50 : vector<16x128xf32>
    %56 = arith.addf %46, %55 : vector<16x128xf32>
    %57 = math.exp %56 : vector<16x128xf32>
    %58 = arith.truncf %57 : vector<16x128xf32> to vector<16x128xbf16>
    %c0_24 = arith.constant 0 : index
    %c0_25 = arith.constant 0 : index
    %59 = vector.load %arg8[%c0_24, %c0_25] : memref<128x256xbf16, #tpu.memory_space<vmem>>, vector<128x256xbf16>
    %cst_26 = arith.constant dense<0.000000e+00> : vector<16x256xf32>
    %60 = tpu.matmul %58, %59, %cst_26 {dimension_numbers = #tpu.dot_dimension_numbers<[1], [0], [0], [1], [0, 0, 1, 1], [], []>} : vector<16x128xbf16>, vector<128x256xbf16>, vector<16x256xf32> -> vector<16x256xf32>
    %c0_27 = arith.constant 0 : index
    %c0_28 = arith.constant 0 : index
    %61 = vector.load %arg9[%c0_27, %c0_28] : memref<1x256xf32, #tpu.memory_space<vmem>>, vector<1x256xf32>
    %62 = vector.broadcast %61 : vector<1x256xf32> to vector<16x256xf32>
    %63 = arith.addf %60, %62 : vector<16x256xf32>
    %cst_29 = arith.constant dense<0xFF800000> : vector<16xf32>
    %64 = vector.multi_reduction <maximumf>, %63, %cst_29 [1] : vector<16x256xf32> to vector<16xf32>
    %65 = vector.shape_cast %64 : vector<16xf32> to vector<16x1xf32>
    %66 = vector.broadcast %65 : vector<16x1xf32> to vector<16x256xf32>
    %67 = arith.subf %63, %66 : vector<16x256xf32>
    %68 = math.exp %67 : vector<16x256xf32>
    %cst_30 = arith.constant dense<0.000000e+00> : vector<16xf32>
    %69 = vector.multi_reduction <add>, %68, %cst_30 [1] : vector<16x256xf32> to vector<16xf32>
    %70 = vector.shape_cast %69 : vector<16xf32> to vector<16x1xf32>
    %cst_31 = arith.constant 1.000000e+00 : f32
    %71 = vector.broadcast %cst_31 : f32 to vector<16x1xf32>
    %72 = arith.divf %71, %70 : vector<16x1xf32>
    %73 = vector.broadcast %72 : vector<16x1xf32> to vector<16x256xf32>
    %74 = arith.mulf %68, %73 : vector<16x256xf32>
    %c0_32 = arith.constant 0 : index
    %c0_33 = arith.constant 0 : index
    %75 = vector.load %arg11[%c0_32, %c0_33] : memref<16x256xf32, #tpu.memory_space<vmem>>, vector<16x256xf32>
    tpu.vector_store %arg11[%c0_32, %c0_33], %74 {strides = array<i32>} : memref<16x256xf32, #tpu.memory_space<vmem>>, vector<16x256xf32>,
    return
  }
  func.func @transform_0(%arg0: i32) -> (i32, i32) {
    %c0_i32 = arith.constant 0 : i32
    %c0_i32_0 = arith.constant 0 : i32
    return %arg0, %c0_i32 : i32, i32
  }
  func.func @transform_1(%arg0: i32) -> (i32, i32) {
    %c0_i32 = arith.constant 0 : i32
    %c0_i32_0 = arith.constant 0 : i32
    %c0_i32_1 = arith.constant 0 : i32
    return %c0_i32, %c0_i32_0 : i32, i32
  }
  func.func @transform_2(%arg0: i32) -> (i32, i32) {
    %c0_i32 = arith.constant 0 : i32
    %c0_i32_0 = arith.constant 0 : i32
    %c0_i32_1 = arith.constant 0 : i32
    return %c0_i32, %c0_i32_0 : i32, i32
  }
  func.func @transform_3(%arg0: i32) -> (i32, i32) {
    %c0_i32 = arith.constant 0 : i32
    %c0_i32_0 = arith.constant 0 : i32
    %c0_i32_1 = arith.constant 0 : i32
    return %c0_i32, %c0_i32_0 : i32, i32
  }
  func.func @transform_4(%arg0: i32) -> (i32, i32) {
    %c0_i32 = arith.constant 0 : i32
    %c0_i32_0 = arith.constant 0 : i32
    %c0_i32_1 = arith.constant 0 : i32
    return %c0_i32, %c0_i32_0 : i32, i32
  }
  func.func @transform_5(%arg0: i32) -> (i32, i32) {
    %c0_i32 = arith.constant 0 : i32
    %c0_i32_0 = arith.constant 0 : i32
    %c0_i32_1 = arith.constant 0 : i32
    return %c0_i32, %c0_i32_0 : i32, i32
  }
  func.func @transform_6(%arg0: i32) -> (i32, i32) {
    %c0_i32 = arith.constant 0 : i32
    %c0_i32_0 = arith.constant 0 : i32
    %c0_i32_1 = arith.constant 0 : i32
    return %c0_i32, %c0_i32_0 : i32, i32
  }
  func.func @transform_7(%arg0: i32) -> (i32, i32) {
    %c0_i32 = arith.constant 0 : i32
    %c0_i32_0 = arith.constant 0 : i32
    %c0_i32_1 = arith.constant 0 : i32
    return %c0_i32, %c0_i32_0 : i32, i32
  }
  func.func @transform_8(%arg0: i32) -> (i32, i32) {
    %c0_i32 = arith.constant 0 : i32
    %c0_i32_0 = arith.constant 0 : i32
    %c0_i32_1 = arith.constant 0 : i32
    return %c0_i32, %c0_i32_0 : i32, i32
  }
  func.func @transform_9(%arg0: i32) -> (i32, i32) {
    %c0_i32 = arith.constant 0 : i32
    %c0_i32_0 = arith.constant 0 : i32
    return %arg0, %c0_i32 : i32, i32
  }
  func.func @transform_10(%arg0: i32) -> (i32, i32) {
    %c0_i32 = arith.constant 0 : i32
    %c0_i32_0 = arith.constant 0 : i32
    return %arg0, %c0_i32 : i32, i32
  }
}

</mosaic_0001>

<llo_original>
// kernel: tpu_custom_call.1
$region0: #{tpu_custom_call.1}
  #allocation0 [shape = 'u32[]', space=smem, size = 0x4, offset = 0x4, fixed_abs, tag = 'smem constant byte address 0x4 - core index']
  #allocation1 [shape = 'u32[144,128]{1,0:T(1,128)}', space=vmem, size = 0x12000, scoped, tag = 'internal scratch']
  %s0 = inlined_call_operand.hbm [shape: bf16[16,256], index: 0, kind: input, shape index: {}]
  %s1 = inlined_call_operand.hbm [shape: bf16[256,128], index: 1, kind: input, shape index: {}]
  %s2 = inlined_call_operand.vmem [shape: f32[1,128], index: 2, kind: input, shape index: {}]
  %s3 = inlined_call_operand.hbm [shape: bf16[128,128], index: 3, kind: input, shape index: {}]
  %s4 = inlined_call_operand.vmem [shape: f32[1,128], index: 4, kind: input, shape index: {}]
  %s5 = inlined_call_operand.hbm [shape: bf16[128,256], index: 5, kind: input, shape index: {}]
  %s6 = inlined_call_operand.vmem [shape: f32[1,256], index: 6, kind: input, shape index: {}]
  %s7 = inlined_call_operand.hbm [shape: bf16[128,256], index: 7, kind: input, shape index: {}]
  %s8 = inlined_call_operand.vmem [shape: f32[1,256], index: 8, kind: input, shape index: {}]
  %s9 = inlined_call_operand.hbm [shape: f32[16,256], index: 9, kind: output, shape index: {0}]
  %s10 = inlined_call_operand.hbm [shape: f32[16,256], index: 10, kind: output, shape index: {1}]
  %11 = xla_tuple %s9, %s10
  %s12 = sld [smem:[#allocation0]]
  $region74: #{tpu_custom_call.1} parent=0
    _
  %s14 = ssub.s32 1, %s12
  %s15 = scalar_select 0, %s14, %s12
  $region1: #{tpu_custom_call.1} parent=0
    #allocation2 [shape = 'u8[8192]{0}', space=vmem, size = 0x2000, scoped, tag = 'input window, operand 0, single buffered']
    #allocation3 [shape = 's32[1]{0}', space=sflag, size = 0x4, scoped, tag = 'scoped memory for tpu_custom_call.1']
    #allocation4 [shape = 's32[1]{0}', space=sflag, size = 0x4, scoped, tag = 'scoped memory for tpu_custom_call.1']
    #allocation5 [shape = 'u8[65536]{0}', space=vmem, size = 0x10000, scoped, tag = 'input window, operand 1, single buffered']
    #allocation6 [shape = 's32[1]{0}', space=sflag, size = 0x4, scoped, tag = 'scoped memory for tpu_custom_call.1']
    #allocation7 [shape = 'u8[32768]{0}', space=vmem, size = 0x8000, scoped, tag = 'input window, operand 3, single buffered']
    #allocation8 [shape = 'u8[65536]{0}', space=vmem, size = 0x10000, scoped, tag = 'input window, operand 5, single buffered']
    #allocation9 [shape = 's32[1]{0}', space=sflag, size = 0x4, scoped, tag = 'scoped memory for tpu_custom_call.1']
    #allocation10 [shape = 'u8[65536]{0}', space=vmem, size = 0x10000, scoped, tag = 'input window, operand 7, single buffered']
    #allocation11 [shape = 'u8[16384]{0}', space=vmem, size = 0x4000, scoped, tag = 'output window, operand 0, single buffered']
    #allocation12 [shape = 'u8[16384]{0}', space=vmem, size = 0x4000, scoped, tag = 'output window, operand 1, single buffered']
    #allocation13 [shape = 's32[1]{0}', space=sflag, size = 0x4, scoped, tag = 'scoped memory for tpu_custom_call.1']
    %16 = vsyncpa [#allocation3], 0
    %17 = vsyncpa [#allocation6], 0
    %18 = vsyncpa [#allocation9], 0
    %19 = vsyncpa [#allocation4], 0
    %20 = vsyncpa [#allocation13], 0
    // Predicated region
    $region2: #{tpu_custom_call.1} parent=1 // pred_check
      _
    $region3: #{tpu_custom_call.1} parent=1 // pred_check_branch
      %22 = sbr.rel (0) target = $region5
    $region4: #{tpu_custom_call.1} parent=1 // pred_region
      %s24 = ssub.s32 256, 256
      %25 = vsyncadd [#allocation3], %s24
      %s26 = sshll.u32 [#allocation2], 4
      %s27 = int_to_ptr.vmem [resolvable:$true] %s26
      %32 = dma.hbm_to_vmem [thread:$0]  %s0, 256, %s27, [#allocation3], 128, 128, 8
    $region5: #{tpu_custom_call.1} parent=1 // pred_fallthru
      _
    // Predicated region
    $region6: #{tpu_custom_call.1} parent=1 // pred_check
      _
    $region7: #{tpu_custom_call.1} parent=1 // pred_check_branch
      %34 = sbr.rel (0) target = $region9
    $region8: #{tpu_custom_call.1} parent=1 // pred_region
      %s36 = ssub.s32 2048, 2048
      %37 = vsyncadd [#allocation6], %s36
      %s38 = sshll.u32 [#allocation5], 4
      %s39 = int_to_ptr.vmem [resolvable:$true] %s38
      %44 = dma.hbm_to_vmem [thread:$0]  %s1, 2048, %s39, [#allocation6], 64, 64, 4
    $region9: #{tpu_custom_call.1} parent=1 // pred_fallthru
      _
    // Predicated region
    $region10: #{tpu_custom_call.1} parent=1 // pred_check
      _
    $region11: #{tpu_custom_call.1} parent=1 // pred_check_branch
      %46 = sbr.rel (0) target = $region13
    $region12: #{tpu_custom_call.1} parent=1 // pred_region
      _
    $region13: #{tpu_custom_call.1} parent=1 // pred_fallthru
      _
    // Predicated region
    $region14: #{tpu_custom_call.1} parent=1 // pred_check
      _
    $region15: #{tpu_custom_call.1} parent=1 // pred_check_branch
      %48 = sbr.rel (0) target = $region17
    $region16: #{tpu_custom_call.1} parent=1 // pred_region
      %s50 = ssub.s32 1024, 1024
      %51 = vsyncadd [#allocation6], %s50
      %s52 = sshll.u32 [#allocation7], 4
      %s53 = int_to_ptr.vmem [resolvable:$true] %s52
      %58 = dma.hbm_to_vmem [thread:$0]  %s3, 1024, %s53, [#allocation6], 64, 64, 4
    $region17: #{tpu_custom_call.1} parent=1 // pred_fallthru
      _
    // Predicated region
    $region18: #{tpu_custom_call.1} parent=1 // pred_check
      _
    $region19: #{tpu_custom_call.1} parent=1 // pred_check_branch
      %60 = sbr.rel (0) target = $region21
    $region20: #{tpu_custom_call.1} parent=1 // pred_region
      _
    $region21: #{tpu_custom_call.1} parent=1 // pred_fallthru
      _
    // Predicated region
    $region22: #{tpu_custom_call.1} parent=1 // pred_check
      _
    $region23: #{tpu_custom_call.1} parent=1 // pred_check_branch
      %62 = sbr.rel (0) target = $region25
    $region24: #{tpu_custom_call.1} parent=1 // pred_region
      %s64 = ssub.s32 2048, 2048
      %65 = vsyncadd [#allocation9], %s64
      %s66 = sshll.u32 [#allocation8], 4
      %s67 = int_to_ptr.vmem [resolvable:$true] %s66
      %72 = dma.hbm_to_vmem [thread:$0]  %s5, 2048, %s67, [#allocation9], 128, 128, 8
    $region25: #{tpu_custom_call.1} parent=1 // pred_fallthru
      _
    // Predicated region
    $region26: #{tpu_custom_call.1} parent=1 // pred_check
      _
    $region27: #{tpu_custom_call.1} parent=1 // pred_check_branch
      %74 = sbr.rel (0) target = $region29
    $region28: #{tpu_custom_call.1} parent=1 // pred_region
      _
    $region29: #{tpu_custom_call.1} parent=1 // pred_fallthru
      _
    // Predicated region
    $region30: #{tpu_custom_call.1} parent=1 // pred_check
      _
    $region31: #{tpu_custom_call.1} parent=1 // pred_check_branch
      %76 = sbr.rel (0) target = $region33
    $region32: #{tpu_custom_call.1} parent=1 // pred_region
      %s78 = ssub.s32 2048, 2048
      %79 = vsyncadd [#allocation9], %s78
      %s80 = sshll.u32 [#allocation10], 4
      %s81 = int_to_ptr.vmem [resolvable:$true] %s80
      %86 = dma.hbm_to_vmem [thread:$0]  %s7, 2048, %s81, [#allocation9], 128, 128, 8
    $region33: #{tpu_custom_call.1} parent=1 // pred_fallthru
      _
    // Predicated region
    $region34: #{tpu_custom_call.1} parent=1 // pred_check
      _
    $region35: #{tpu_custom_call.1} parent=1 // pred_check_branch
      %88 = sbr.rel (0) target = $region37
    $region36: #{tpu_custom_call.1} parent=1 // pred_region
      _
    $region37: #{tpu_custom_call.1} parent=1 // pred_fallthru
      _
    // Predicated region
    $region38: #{tpu_custom_call.1} parent=1 // pred_check
      _
    $region39: #{tpu_custom_call.1} parent=1 // pred_check_branch
      %90 = sbr.rel (0) target = $region41
    $region40: #{tpu_custom_call.1} parent=1 // pred_region
      %91 = dma.done [#allocation3], 256
    $region41: #{tpu_custom_call.1} parent=1 // pred_fallthru
      _
    // Predicated region
    $region42: #{tpu_custom_call.1} parent=1 // pred_check
      _
    $region43: #{tpu_custom_call.1} parent=1 // pred_check_branch
      %93 = sbr.rel (0) target = $region45
    $region44: #{tpu_custom_call.1} parent=1 // pred_region
      %94 = dma.done [#allocation6], 2048
    $region45: #{tpu_custom_call.1} parent=1 // pred_fallthru
      _
    // Predicated region
    $region46: #{tpu_custom_call.1} parent=1 // pred_check
      _
    $region47: #{tpu_custom_call.1} parent=1 // pred_check_branch
      %96 = sbr.rel (0) target = $region49
    $region48: #{tpu_custom_call.1} parent=1 // pred_region
      %97 = dma.done [#allocation6], 1024
    $region49: #{tpu_custom_call.1} parent=1 // pred_fallthru
      _
    // Predicated region
    $region50: #{tpu_custom_call.1} parent=1 // pred_check
      _
    $region51: #{tpu_custom_call.1} parent=1 // pred_check_branch
      %99 = sbr.rel (0) target = $region53
    $region52: #{tpu_custom_call.1} parent=1 // pred_region
      %100 = dma.done [#allocation9], 2048
    $region53: #{tpu_custom_call.1} parent=1 // pred_fallthru
      _
    // Predicated region
    $region54: #{tpu_custom_call.1} parent=1 // pred_check
      _
    $region55: #{tpu_custom_call.1} parent=1 // pred_check_branch
      %102 = sbr.rel (0) target = $region57
    $region56: #{tpu_custom_call.1} parent=1 // pred_region
      %103 = dma.done [#allocation9], 2048
    $region57: #{tpu_custom_call.1} parent=1 // pred_fallthru
      _
    %v105 = vld [vmem:[#allocation2] sm:$0xff]
    %v106 = vld [vmem:[#allocation2 + $0x8] sm:$0xff]
    %v107 = vld [vmem:[#allocation5] sm:$0xf]
    %v108 = vld [vmem:[#allocation5 + $0x4] sm:$0xf]
    %v109 = vld [vmem:[#allocation5 + $0x8] sm:$0xf]
    %v110 = vld [vmem:[#allocation5 + $0xc] sm:$0xf]
    %v111 = vld [vmem:[#allocation5 + $0x10] sm:$0xf]
    %v112 = vld [vmem:[#allocation5 + $0x14] sm:$0xf]
    %v113 = vld [vmem:[#allocation5 + $0x18] sm:$0xf]
    %v114 = vld [vmem:[#allocation5 + $0x1c] sm:$0xf]
    %v115 = vld [vmem:[#allocation5 + $0x20] sm:$0xf]
    %v116 = vld [vmem:[#allocation5 + $0x24] sm:$0xf]
    %v117 = vld [vmem:[#allocation5 + $0x28] sm:$0xf]
    %v118 = vld [vmem:[#allocation5 + $0x2c] sm:$0xf]
    %v119 = vld [vmem:[#allocation5 + $0x30] sm:$0xf]
    %v120 = vld [vmem:[#allocation5 + $0x34] sm:$0xf]
    %v121 = vld [vmem:[#allocation5 + $0x38] sm:$0xf]
    %v122 = vld [vmem:[#allocation5 + $0x3c] sm:$0xf]
    %v123 = vld [vmem:[#allocation5 + $0x40] sm:$0xf]
    %v124 = vld [vmem:[#allocation5 + $0x44] sm:$0xf]
    %v125 = vld [vmem:[#allocation5 + $0x48] sm:$0xf]
    %v126 = vld [vmem:[#allocation5 + $0x4c] sm:$0xf]
    %v127 = vld [vmem:[#allocation5 + $0x50] sm:$0xf]
    %v128 = vld [vmem:[#allocation5 + $0x54] sm:$0xf]
    %v129 = vld [vmem:[#allocation5 + $0x58] sm:$0xf]
    %v130 = vld [vmem:[#allocation5 + $0x5c] sm:$0xf]
    %v131 = vld [vmem:[#allocation5 + $0x60] sm:$0xf]
    %v132 = vld [vmem:[#allocation5 + $0x64] sm:$0xf]
    %v133 = vld [vmem:[#allocation5 + $0x68] sm:$0xf]
    %v134 = vld [vmem:[#allocation5 + $0x6c] sm:$0xf]
    %v135 = vld [vmem:[#allocation5 + $0x70] sm:$0xf]
    %v136 = vld [vmem:[#allocation5 + $0x74] sm:$0xf]
    %v137 = vld [vmem:[#allocation5 + $0x78] sm:$0xf]
    %v138 = vld [vmem:[#allocation5 + $0x7c] sm:$0xf]
    %v139 = vld [vmem:[%s2] sm:$0x1]
    %v141 = vlaneseq
    %v142 = vshrl.u32 %v141, 7
    %v143 = vsub.s32 0, %v142
    %v144 = vrot.slane %v139, %v143
    %v148 = vunpack.c.l.b16 %v105
    %v149 = vunpack.c.h.b16 %v105
    %v150 = vunpack.c.l.b16 %v106
    %v151 = vunpack.c.h.b16 %v106
    %v152 = vpack.c.b16 %v150, %v148
    %v153 = vpack.c.b16 %v151, %v149
    %v188 = vunpack.c.l.b16 %v107
    %v189 = vunpack.c.l.b16 %v108
    %v190 = vunpack.c.l.b16 %v109
    %v191 = vunpack.c.l.b16 %v110
    %v192 = vunpack.c.l.b16 %v111
    %v193 = vunpack.c.l.b16 %v112
    %v194 = vunpack.c.l.b16 %v113
    %v195 = vunpack.c.l.b16 %v114
    %v196 = vunpack.c.l.b16 %v115
    %v197 = vunpack.c.l.b16 %v116
    %v198 = vunpack.c.l.b16 %v117
    %v199 = vunpack.c.l.b16 %v118
    %v200 = vunpack.c.l.b16 %v119
    %v201 = vunpack.c.l.b16 %v120
    %v202 = vunpack.c.l.b16 %v121
    %v203 = vunpack.c.l.b16 %v122
    %v204 = vunpack.c.l.b16 %v123
    %v205 = vunpack.c.l.b16 %v124
    %v206 = vunpack.c.l.b16 %v125
    %v207 = vunpack.c.l.b16 %v126
    %v208 = vunpack.c.l.b16 %v127
    %v209 = vunpack.c.l.b16 %v128
    %v210 = vunpack.c.l.b16 %v129
    %v211 = vunpack.c.l.b16 %v130
    %v212 = vunpack.c.l.b16 %v131
    %v213 = vunpack.c.l.b16 %v132
    %v214 = vunpack.c.l.b16 %v133
    %v215 = vunpack.c.l.b16 %v134
    %v216 = vunpack.c.l.b16 %v135
    %v217 = vunpack.c.l.b16 %v136
    %v218 = vunpack.c.l.b16 %v137
    %v219 = vunpack.c.l.b16 %v138
    %v220 = vpack.c.b16 %v189, %v188
    %v221 = vpack.c.b16 %v191, %v190
    %v222 = vpack.c.b16 %v193, %v192
    %v223 = vpack.c.b16 %v195, %v194
    %v224 = vpack.c.b16 %v197, %v196
    %v225 = vpack.c.b16 %v199, %v198
    %v226 = vpack.c.b16 %v201, %v200
    %v227 = vpack.c.b16 %v203, %v202
    %v228 = vpack.c.b16 %v205, %v204
    %v229 = vpack.c.b16 %v207, %v206
    %v230 = vpack.c.b16 %v209, %v208
    %v231 = vpack.c.b16 %v211, %v210
    %v232 = vpack.c.b16 %v213, %v212
    %v233 = vpack.c.b16 %v215, %v214
    %v234 = vpack.c.b16 %v217, %v216
    %v235 = vpack.c.b16 %v219, %v218
    %252 = vmatprep.subr.bf16.mxu0 0
    %253 = vmatpush1.bf16.msra.mxu0 %v227
    %254 = vmatprep.subr.bf16.mxu0 0
    %255 = vmatpush1.bf16.msra.mxu0 %v226
    %256 = vmatprep.subr.bf16.mxu0 0
    %257 = vmatpush1.bf16.msra.mxu0 %v225
    %258 = vmatprep.subr.bf16.mxu0 0
    %259 = vmatpush1.bf16.msra.mxu0 %v224
    %260 = vmatprep.subr.bf16.mxu0 0
    %261 = vmatpush1.bf16.msra.mxu0 %v223
    %262 = vmatprep.subr.bf16.mxu0 0
    %263 = vmatpush1.bf16.msra.mxu0 %v222
    %264 = vmatprep.subr.bf16.mxu0 0
    %265 = vmatpush1.bf16.msra.mxu0 %v221
    %266 = vmatprep.subr.bf16.mxu0 0
    %267 = vmatpush1.bf16.msra.mxu0 %v220
    %268 = vmatprep.subr.bf16.mxu0 0
    %269 = vmatpush2.bf16.msra.mxu0 %v235
    %270 = vmatprep.subr.bf16.mxu0 0
    %271 = vmatpush2.bf16.msra.mxu0 %v234
    %272 = vmatprep.subr.bf16.mxu0 0
    %273 = vmatpush2.bf16.msra.mxu0 %v233
    %274 = vmatprep.subr.bf16.mxu0 0
    %275 = vmatpush2.bf16.msra.mxu0 %v232
    %276 = vmatprep.subr.bf16.mxu0 0
    %277 = vmatpush2.bf16.msra.mxu0 %v231
    %278 = vmatprep.subr.bf16.mxu0 0
    %279 = vmatpush2.bf16.msra.mxu0 %v230
    %280 = vmatprep.subr.bf16.mxu0 0
    %281 = vmatpush2.bf16.msra.mxu0 %v229
    %282 = vmatprep.subr.bf16.mxu0 0
    %283 = vmatpush2.bf16.msra.mxu0 %v228
    %284 = vmatprep.mubr.bf16.mxu0 %v153
    %285 = vmatmul.mubr.bf16.gmra.mxu0 %v152
    %v286 = vpop.f32.mrf.mxu0
    %v287 = vadd.f32 %v144, %v286
    %v288 = vpop.f32.mrf.mxu0
    %v289 = vpop.f32.mrf.mxu0
    %v290 = vadd.f32 %v144, %v289
    %v291 = vpop.f32.mrf.mxu0
    %292 = vdwg.mxu0
    %v293 = vmax.f32 %v287, 0.0
    %v294 = vmax.f32 %v290, 0.0
    %vm295 = vcmp.ne.f32.partialorder %v287, %v287
    %vm296 = vcmp.ne.f32.partialorder %v290, %v290
    %v297 = vadd.f32 %v287, 0.0
    %v298 = vadd.f32 %v290, 0.0
    %v299 = vand.u32 2147483647, %v287
    %v300 = vand.u32 2147483647, %v290
    %v301 = vsub.f32 0.0, %v299
    %v302 = vsub.f32 0.0, %v300
    %v303 = vmul.f32 %v301, 1.442695
    %v304 = vpow.pop %v303
    %v305 = vmul.f32 %v302, 1.442695
    %v306 = vpow.pop %v305
    %v307 = vadd.f32 %v304, 1.0
    %v308 = vlog2.pop %v307
    %v309 = vmul.f32 %v308, 0.6931472
    %v310 = vmul.f32 -0.5, %v304
    %v311 = vadd.f32 %v310, 1.0
    %v312 = vmul.f32 %v311, %v304
    %v313 = vand.u32 2147483647, %v304
    %vm314 = vcmp.lt.f32.partialorder %v313, 0.0004427343
    %v315 = vsel %vm314, %v312, %v309
    %v316 = vadd.f32 %v306, 1.0
    %v317 = vlog2.pop %v316
    %v318 = vmul.f32 %v317, 0.6931472
    %v319 = vmul.f32 -0.5, %v306
    %v320 = vadd.f32 %v319, 1.0
    %v321 = vmul.f32 %v320, %v306
    %v322 = vand.u32 2147483647, %v306
    %vm323 = vcmp.lt.f32.partialorder %v322, 0.0004427343
    %v324 = vsel %vm323, %v321, %v318
    %v325 = vadd.f32 %v293, %v315
    %v326 = vadd.f32 %v294, %v324
    %v327 = vsel %vm295, %v297, %v325
    %v328 = vsel %vm296, %v298, %v326
    %v329 = vpack.c.bf16 %v328, %v327
    %v330 = vld [vmem:[#allocation7] sm:$0xf]
    %v331 = vld [vmem:[#allocation7 + $0x4] sm:$0xf]
    %v332 = vld [vmem:[#allocation7 + $0x8] sm:$0xf]
    %v333 = vld [vmem:[#allocation7 + $0xc] sm:$0xf]
    %v334 = vld [vmem:[#allocation7 + $0x10] sm:$0xf]
    %v335 = vld [vmem:[#allocation7 + $0x14] sm:$0xf]
    %v336 = vld [vmem:[#allocation7 + $0x18] sm:$0xf]
    %v337 = vld [vmem:[#allocation7 + $0x1c] sm:$0xf]
    %v338 = vld [vmem:[#allocation7 + $0x20] sm:$0xf]
    %v339 = vld [vmem:[#allocation7 + $0x24] sm:$0xf]
    %v340 = vld [vmem:[#allocation7 + $0x28] sm:$0xf]
    %v341 = vld [vmem:[#allocation7 + $0x2c] sm:$0xf]
    %v342 = vld [vmem:[#allocation7 + $0x30] sm:$0xf]
    %v343 = vld [vmem:[#allocation7 + $0x34] sm:$0xf]
    %v344 = vld [vmem:[#allocation7 + $0x38] sm:$0xf]
    %v345 = vld [vmem:[#allocation7 + $0x3c] sm:$0xf]
    %v346 = vld [vmem:[%s4] sm:$0x1]
    %v348 = vlaneseq
    %v349 = vshrl.u32 %v348, 7
    %v350 = vsub.s32 0, %v349
    %v351 = vrot.slane %v346, %v350
    %v369 = vunpack.c.l.b16 %v330
    %v370 = vunpack.c.l.b16 %v331
    %v371 = vunpack.c.l.b16 %v332
    %v372 = vunpack.c.l.b16 %v333
    %v373 = vunpack.c.l.b16 %v334
    %v374 = vunpack.c.l.b16 %v335
    %v375 = vunpack.c.l.b16 %v336
    %v376 = vunpack.c.l.b16 %v337
    %v377 = vunpack.c.l.b16 %v338
    %v378 = vunpack.c.l.b16 %v339
    %v379 = vunpack.c.l.b16 %v340
    %v380 = vunpack.c.l.b16 %v341
    %v381 = vunpack.c.l.b16 %v342
    %v382 = vunpack.c.l.b16 %v343
    %v383 = vunpack.c.l.b16 %v344
    %v384 = vunpack.c.l.b16 %v345
    %v385 = vpack.c.b16 %v370, %v369
    %v386 = vpack.c.b16 %v372, %v371
    %v387 = vpack.c.b16 %v374, %v373
    %v388 = vpack.c.b16 %v376, %v375
    %v389 = vpack.c.b16 %v378, %v377
    %v390 = vpack.c.b16 %v380, %v379
    %v391 = vpack.c.b16 %v382, %v381
    %v392 = vpack.c.b16 %v384, %v383
    %401 = vmatprep.subr.bf16.mxu0 0
    %402 = vmatpush1.bf16.msra.mxu0 %v392
    %403 = vmatprep.subr.bf16.mxu0 0
    %404 = vmatpush1.bf16.msra.mxu0 %v391
    %405 = vmatprep.subr.bf16.mxu0 0
    %406 = vmatpush1.bf16.msra.mxu0 %v390
    %407 = vmatprep.subr.bf16.mxu0 0
    %408 = vmatpush1.bf16.msra.mxu0 %v389
    %409 = vmatprep.subr.bf16.mxu0 0
    %410 = vmatpush1.bf16.msra.mxu0 %v388
    %411 = vmatprep.subr.bf16.mxu0 0
    %412 = vmatpush1.bf16.msra.mxu0 %v387
    %413 = vmatprep.subr.bf16.mxu0 0
    %414 = vmatpush1.bf16.msra.mxu0 %v386
    %415 = vmatprep.subr.bf16.mxu0 0
    %416 = vmatpush1.bf16.msra.mxu0 %v385
    %417 = vmatprep.subr.bf16.mxu0 0
    %418 = vmatpush2.bf16.msra.mxu0 0
    %419 = vmatprep.subr.bf16.mxu0 0
    %420 = vmatpush2.bf16.msra.mxu0 0
    %421 = vmatprep.subr.bf16.mxu0 0
    %422 = vmatpush2.bf16.msra.mxu0 0
    %423 = vmatprep.subr.bf16.mxu0 0
    %424 = vmatpush2.bf16.msra.mxu0 0
    %425 = vmatprep.subr.bf16.mxu0 0
    %426 = vmatpush2.bf16.msra.mxu0 0
    %427 = vmatprep.subr.bf16.mxu0 0
    %428 = vmatpush2.bf16.msra.mxu0 0
    %429 = vmatprep.subr.bf16.mxu0 0
    %430 = vmatpush2.bf16.msra.mxu0 0
    %431 = vmatprep.subr.bf16.mxu0 0
    %432 = vmatpush2.bf16.msra.mxu0 0
    %433 = vmatprep.mubr.bf16.mxu0 0
    %434 = vmatmul.mubr.bf16.gmra.mxu0 %v329
    %v435 = vpop.f32.mrf.mxu0
    %v436 = vadd.f32 %v351, %v435
    %v437 = vpop.f32.mrf.mxu0
    %v438 = vpop.f32.mrf.mxu0
    %v439 = vadd.f32 %v351, %v438
    %v440 = vpop.f32.mrf.mxu0
    %441 = vdwg.mxu0
    %v442 = vmax.f32 %v436, 0.0
    %v443 = vmax.f32 %v439, 0.0
    %vm444 = vcmp.ne.f32.partialorder %v436, %v436
    %vm445 = vcmp.ne.f32.partialorder %v439, %v439
    %v446 = vadd.f32 %v436, 0.0
    %v447 = vadd.f32 %v439, 0.0
    %v448 = vand.u32 2147483647, %v436
    %v449 = vand.u32 2147483647, %v439
    %v450 = vsub.f32 0.0, %v448
    %v451 = vsub.f32 0.0, %v449
    %v452 = vmul.f32 %v450, 1.442695
    %v453 = vpow.pop %v452
    %v454 = vmul.f32 %v451, 1.442695
    %v455 = vpow.pop %v454
    %v456 = vadd.f32 %v453, 1.0
    %v457 = vlog2.pop %v456
    %v458 = vmul.f32 %v457, 0.6931472
    %v459 = vmul.f32 -0.5, %v453
    %v460 = vadd.f32 %v459, 1.0
    %v461 = vmul.f32 %v460, %v453
    %v462 = vand.u32 2147483647, %v453
    %vm463 = vcmp.lt.f32.partialorder %v462, 0.0004427343
    %v464 = vsel %vm463, %v461, %v458
    %v465 = vadd.f32 %v455, 1.0
    %v466 = vlog2.pop %v465
    %v467 = vmul.f32 %v466, 0.6931472
    %v468 = vmul.f32 -0.5, %v455
    %v469 = vadd.f32 %v468, 1.0
    %v470 = vmul.f32 %v469, %v455
    %v471 = vand.u32 2147483647, %v455
    %vm472 = vcmp.lt.f32.partialorder %v471, 0.0004427343
    %v473 = vsel %vm472, %v470, %v467
    %v474 = vadd.f32 %v442, %v464
    %v475 = vadd.f32 %v443, %v473
    %v476 = vsel %vm444, %v446, %v474
    %v477 = vsel %vm445, %v447, %v475
    %v478 = vpack.c.bf16 %v477, %v476
    %v479 = vld [vmem:[#allocation8] sm:$0xff]
    %v480 = vld [vmem:[#allocation8 + $0x8] sm:$0xff]
    %v481 = vld [vmem:[#allocation8 + $0x10] sm:$0xff]
    %v482 = vld [vmem:[#allocation8 + $0x18] sm:$0xff]
    %v483 = vld [vmem:[#allocation8 + $0x20] sm:$0xff]
    %v484 = vld [vmem:[#allocation8 + $0x28] sm:$0xff]
    %v485 = vld [vmem:[#allocation8 + $0x30] sm:$0xff]
    %v486 = vld [vmem:[#allocation8 + $0x38] sm:$0xff]
    %v487 = vld [vmem:[#allocation8 + $0x40] sm:$0xff]
    %v488 = vld [vmem:[#allocation8 + $0x48] sm:$0xff]
    %v489 = vld [vmem:[#allocation8 + $0x50] sm:$0xff]
    %v490 = vld [vmem:[#allocation8 + $0x58] sm:$0xff]
    %v491 = vld [vmem:[#allocation8 + $0x60] sm:$0xff]
    %v492 = vld [vmem:[#allocation8 + $0x68] sm:$0xff]
    %v493 = vld [vmem:[#allocation8 + $0x70] sm:$0xff]
    %v494 = vld [vmem:[#allocation8 + $0x78] sm:$0xff]
    %v495 = vld [vmem:[%s6] sm:$0x3]
    %v497 = vlaneseq
    %v498 = vshrl.u32 %v497, 7
    %v499 = vsub.s32 0, %v498
    %v500 = vrot.slane %v495, %v499
    %v501 = vlaneseq
    %v502 = vshrl.u32 %v501, 7
    %v503 = vsub.s32 1, %v502
    %v504 = vrot.slane %v495, %v503
    %v523 = vunpack.c.l.b16 %v479
    %v524 = vunpack.c.h.b16 %v479
    %v525 = vunpack.c.l.b16 %v480
    %v526 = vunpack.c.h.b16 %v480
    %v527 = vunpack.c.l.b16 %v481
    %v528 = vunpack.c.h.b16 %v481
    %v529 = vunpack.c.l.b16 %v482
    %v530 = vunpack.c.h.b16 %v482
    %v531 = vunpack.c.l.b16 %v483
    %v532 = vunpack.c.h.b16 %v483
    %v533 = vunpack.c.l.b16 %v484
    %v534 = vunpack.c.h.b16 %v484
    %v535 = vunpack.c.l.b16 %v485
    %v536 = vunpack.c.h.b16 %v485
    %v537 = vunpack.c.l.b16 %v486
    %v538 = vunpack.c.h.b16 %v486
    %v539 = vunpack.c.l.b16 %v487
    %v540 = vunpack.c.h.b16 %v487
    %v541 = vunpack.c.l.b16 %v488
    %v542 = vunpack.c.h.b16 %v488
    %v543 = vunpack.c.l.b16 %v489
    %v544 = vunpack.c.h.b16 %v489
    %v545 = vunpack.c.l.b16 %v490
    %v546 = vunpack.c.h.b16 %v490
    %v547 = vunpack.c.l.b16 %v491
    %v548 = vunpack.c.h.b16 %v491
    %v549 = vunpack.c.l.b16 %v492
    %v550 = vunpack.c.h.b16 %v492
    %v551 = vunpack.c.l.b16 %v493
    %v552 = vunpack.c.h.b16 %v493
    %v553 = vunpack.c.l.b16 %v494
    %v554 = vunpack.c.h.b16 %v494
    %v555 = vpack.c.b16 %v525, %v523
    %v556 = vpack.c.b16 %v526, %v524
    %v557 = vpack.c.b16 %v529, %v527
    %v558 = vpack.c.b16 %v530, %v528
    %v559 = vpack.c.b16 %v533, %v531
    %v560 = vpack.c.b16 %v534, %v532
    %v561 = vpack.c.b16 %v537, %v535
    %v562 = vpack.c.b16 %v538, %v536
    %v563 = vpack.c.b16 %v541, %v539
    %v564 = vpack.c.b16 %v542, %v540
    %v565 = vpack.c.b16 %v545, %v543
    %v566 = vpack.c.b16 %v546, %v544
    %v567 = vpack.c.b16 %v549, %v547
    %v568 = vpack.c.b16 %v550, %v548
    %v569 = vpack.c.b16 %v553, %v551
    %v570 = vpack.c.b16 %v554, %v552
    %587 = vmatprep.subr.bf16.mxu0 %v570
    %588 = vmatpush1.bf16.msra.mxu0 %v569
    %589 = vmatprep.subr.bf16.mxu0 %v568
    %590 = vmatpush1.bf16.msra.mxu0 %v567
    %591 = vmatprep.subr.bf16.mxu0 %v566
    %592 = vmatpush1.bf16.msra.mxu0 %v565
    %593 = vmatprep.subr.bf16.mxu0 %v564
    %594 = vmatpush1.bf16.msra.mxu0 %v563
    %595 = vmatprep.subr.bf16.mxu0 %v562
    %596 = vmatpush1.bf16.msra.mxu0 %v561
    %597 = vmatprep.subr.bf16.mxu0 %v560
    %598 = vmatpush1.bf16.msra.mxu0 %v559
    %599 = vmatprep.subr.bf16.mxu0 %v558
    %600 = vmatpush1.bf16.msra.mxu0 %v557
    %601 = vmatprep.subr.bf16.mxu0 %v556
    %602 = vmatpush1.bf16.msra.mxu0 %v555
    %603 = vmatprep.subr.bf16.mxu0 0
    %604 = vmatpush2.bf16.msra.mxu0 0
    %605 = vmatprep.subr.bf16.mxu0 0
    %606 = vmatpush2.bf16.msra.mxu0 0
    %607 = vmatprep.subr.bf16.mxu0 0
    %608 = vmatpush2.bf16.msra.mxu0 0
    %609 = vmatprep.subr.bf16.mxu0 0
    %610 = vmatpush2.bf16.msra.mxu0 0
    %611 = vmatprep.subr.bf16.mxu0 0
    %612 = vmatpush2.bf16.msra.mxu0 0
    %613 = vmatprep.subr.bf16.mxu0 0
    %614 = vmatpush2.bf16.msra.mxu0 0
    %615 = vmatprep.subr.bf16.mxu0 0
    %616 = vmatpush2.bf16.msra.mxu0 0
    %617 = vmatprep.subr.bf16.mxu0 0
    %618 = vmatpush2.bf16.msra.mxu0 0
    %619 = vmatprep.mubr.bf16.mxu0 0
    %620 = vmatmul.mubr.bf16.gmra.mxu0 %v478
    %v621 = vpop.f32.mrf.mxu0
    %v622 = vadd.f32 %v500, %v621
    %v623 = vpop.f32.mrf.mxu0
    %v624 = vadd.f32 %v504, %v623
    %v625 = vpop.f32.mrf.mxu0
    %v626 = vadd.f32 %v500, %v625
    %v627 = vpop.f32.mrf.mxu0
    %v628 = vadd.f32 %v504, %v627
    %629 = vdwg.mxu0
    %v630 = vmul.f32 %v624, 0.5
    %v631 = vmul.f32 %v628, 0.5
    %v632 = vmul.f32 %v630, 1.442695
    %v633 = vpow.pop %v632
    %v634 = vmul.f32 %v631, 1.442695
    %v635 = vpow.pop %v634
    %636 = vst [vmem:[#allocation11] sm:$0xff] %v622
    %637 = vst [vmem:[#allocation11 + $0x10] sm:$0xff] %v626
    %638 = vst [vmem:[#allocation11 + $0x8] sm:$0xff] %v633
    %639 = vst [vmem:[#allocation11 + $0x18] sm:$0xff] %v635
    %v640 = vmul.f32 %v633, 0.5
    %v641 = vmul.f32 %v635, 0.5
    %v642 = vmul.f32 %v640, %v633
    %v643 = vmul.f32 %v641, %v635
    %v644 = vadd.f32 %v622, %v642
    %v645 = vadd.f32 %v626, %v643
    %v646 = vmul.f32 %v644, 1.442695
    %v647 = vpow.pop %v646
    %v648 = vmul.f32 %v645, 1.442695
    %v649 = vpow.pop %v648
    %v650 = vpack.c.bf16 %v649, %v647
    %v651 = vld [vmem:[#allocation10] sm:$0xff]
    %v652 = vld [vmem:[#allocation10 + $0x8] sm:$0xff]
    %v653 = vld [vmem:[#allocation10 + $0x10] sm:$0xff]
    %v654 = vld [vmem:[#allocation10 + $0x18] sm:$0xff]
    %v655 = vld [vmem:[#allocation10 + $0x20] sm:$0xff]
    %v656 = vld [vmem:[#allocation10 + $0x28] sm:$0xff]
    %v657 = vld [vmem:[#allocation10 + $0x30] sm:$0xff]
    %v658 = vld [vmem:[#allocation10 + $0x38] sm:$0xff]
    %v659 = vld [vmem:[#allocation10 + $0x40] sm:$0xff]
    %v660 = vld [vmem:[#allocation10 + $0x48] sm:$0xff]
    %v661 = vld [vmem:[#allocation10 + $0x50] sm:$0xff]
    %v662 = vld [vmem:[#allocation10 + $0x58] sm:$0xff]
    %v663 = vld [vmem:[#allocation10 + $0x60] sm:$0xff]
    %v664 = vld [vmem:[#allocation10 + $0x68] sm:$0xff]
    %v665 = vld [vmem:[#allocation10 + $0x70] sm:$0xff]
    %v666 = vld [vmem:[#allocation10 + $0x78] sm:$0xff]
    %v667 = vld [vmem:[%s8] sm:$0x3]
    %v669 = vlaneseq
    %v670 = vshrl.u32 %v669, 7
    %v671 = vsub.s32 0, %v670
    %v672 = vrot.slane %v667, %v671
    %v673 = vlaneseq
    %v674 = vshrl.u32 %v673, 7
    %v675 = vsub.s32 1, %v674
    %v676 = vrot.slane %v667, %v675
    %v695 = vunpack.c.l.b16 %v651
    %v696 = vunpack.c.h.b16 %v651
    %v697 = vunpack.c.l.b16 %v652
    %v698 = vunpack.c.h.b16 %v652
    %v699 = vunpack.c.l.b16 %v653
    %v700 = vunpack.c.h.b16 %v653
    %v701 = vunpack.c.l.b16 %v654
    %v702 = vunpack.c.h.b16 %v654
    %v703 = vunpack.c.l.b16 %v655
    %v704 = vunpack.c.h.b16 %v655
    %v705 = vunpack.c.l.b16 %v656
    %v706 = vunpack.c.h.b16 %v656
    %v707 = vunpack.c.l.b16 %v657
    %v708 = vunpack.c.h.b16 %v657
    %v709 = vunpack.c.l.b16 %v658
    %v710 = vunpack.c.h.b16 %v658
    %v711 = vunpack.c.l.b16 %v659
    %v712 = vunpack.c.h.b16 %v659
    %v713 = vunpack.c.l.b16 %v660
    %v714 = vunpack.c.h.b16 %v660
    %v715 = vunpack.c.l.b16 %v661
    %v716 = vunpack.c.h.b16 %v661
    %v717 = vunpack.c.l.b16 %v662
    %v718 = vunpack.c.h.b16 %v662
    %v719 = vunpack.c.l.b16 %v663
    %v720 = vunpack.c.h.b16 %v663
    %v721 = vunpack.c.l.b16 %v664
    %v722 = vunpack.c.h.b16 %v664
    %v723 = vunpack.c.l.b16 %v665
    %v724 = vunpack.c.h.b16 %v665
    %v725 = vunpack.c.l.b16 %v666
    %v726 = vunpack.c.h.b16 %v666
    %v727 = vpack.c.b16 %v697, %v695
    %v728 = vpack.c.b16 %v698, %v696
    %v729 = vpack.c.b16 %v701, %v699
    %v730 = vpack.c.b16 %v702, %v700
    %v731 = vpack.c.b16 %v705, %v703
    %v732 = vpack.c.b16 %v706, %v704
    %v733 = vpack.c.b16 %v709, %v707
    %v734 = vpack.c.b16 %v710, %v708
    %v735 = vpack.c.b16 %v713, %v711
    %v736 = vpack.c.b16 %v714, %v712
    %v737 = vpack.c.b16 %v717, %v715
    %v738 = vpack.c.b16 %v718, %v716
    %v739 = vpack.c.b16 %v721, %v719
    %v740 = vpack.c.b16 %v722, %v720
    %v741 = vpack.c.b16 %v725, %v723
    %v742 = vpack.c.b16 %v726, %v724
    %759 = vmatprep.subr.bf16.mxu0 %v742
    %760 = vmatpush1.bf16.msra.mxu0 %v741
    %761 = vmatprep.subr.bf16.mxu0 %v740
    %762 = vmatpush1.bf16.msra.mxu0 %v739
    %763 = vmatprep.subr.bf16.mxu0 %v738
    %764 = vmatpush1.bf16.msra.mxu0 %v737
    %765 = vmatprep.subr.bf16.mxu0 %v736
    %766 = vmatpush1.bf16.msra.mxu0 %v735
    %767 = vmatprep.subr.bf16.mxu0 %v734
    %768 = vmatpush1.bf16.msra.mxu0 %v733
    %769 = vmatprep.subr.bf16.mxu0 %v732
    %770 = vmatpush1.bf16.msra.mxu0 %v731
    %771 = vmatprep.subr.bf16.mxu0 %v730
    %772 = vmatpush1.bf16.msra.mxu0 %v729
    %773 = vmatprep.subr.bf16.mxu0 %v728
    %774 = vmatpush1.bf16.msra.mxu0 %v727
    %775 = vmatprep.subr.bf16.mxu0 0
    %776 = vmatpush2.bf16.msra.mxu0 0
    %777 = vmatprep.subr.bf16.mxu0 0
    %778 = vmatpush2.bf16.msra.mxu0 0
    %779 = vmatprep.subr.bf16.mxu0 0
    %780 = vmatpush2.bf16.msra.mxu0 0
    %781 = vmatprep.subr.bf16.mxu0 0
    %782 = vmatpush2.bf16.msra.mxu0 0
    %783 = vmatprep.subr.bf16.mxu0 0
    %784 = vmatpush2.bf16.msra.mxu0 0
    %785 = vmatprep.subr.bf16.mxu0 0
    %786 = vmatpush2.bf16.msra.mxu0 0
    %787 = vmatprep.subr.bf16.mxu0 0
    %788 = vmatpush2.bf16.msra.mxu0 0
    %789 = vmatprep.subr.bf16.mxu0 0
    %790 = vmatpush2.bf16.msra.mxu0 0
    %791 = vmatprep.mubr.bf16.mxu0 0
    %792 = vmatmul.mubr.bf16.gmra.mxu0 %v650
    %v793 = vpop.f32.mrf.mxu0
    %v794 = vadd.f32 %v672, %v793
    %v795 = vpop.f32.mrf.mxu0
    %v796 = vadd.f32 %v676, %v795
    %v797 = vpop.f32.mrf.mxu0
    %v798 = vadd.f32 %v672, %v797
    %v799 = vpop.f32.mrf.mxu0
    %v800 = vadd.f32 %v676, %v799
    %801 = vdwg.mxu0
    %v802 = vmax.f32 %v794, %v796
    %803 = vmax.xlane.f32.xlu0 %v802
    %v804 = vpop.xlane.xlu0 %803
    %v805 = vmax.f32 %v798, %v800
    %806 = vmax.xlane.f32.xlu0 %v805
    %v807 = vpop.xlane.xlu0 %806
    %v808 = vsub.f32 %v794, %v804
    %v809 = vsub.f32 %v796, %v804
    %v810 = vsub.f32 %v798, %v807
    %v811 = vsub.f32 %v800, %v807
    %v812 = vmul.f32 %v808, 1.442695
    %v813 = vpow.pop %v812
    %v814 = vmul.f32 %v809, 1.442695
    %v815 = vpow.pop %v814
    %v816 = vmul.f32 %v810, 1.442695
    %v817 = vpow.pop %v816
    %v818 = vmul.f32 %v811, 1.442695
    %v819 = vpow.pop %v818
    %v820 = vadd.f32 %v813, %v815
    %821 = vadd.xlane.f32.xlu0 %v820
    %v822 = vpop.xlane.xlu0 %821
    %v823 = vadd.f32 %v817, %v819
    %824 = vadd.xlane.f32.xlu0 %v823
    %v825 = vpop.xlane.xlu0 %824
    %v826 = vrcp.pop %v822
    %v827 = vmul.f32 1.0, %v826
    %v828 = vrcp.pop %v825
    %v829 = vmul.f32 1.0, %v828
    %v830 = vmul.f32 %v813, %v827
    %v831 = vmul.f32 %v815, %v827
    %v832 = vmul.f32 %v817, %v829
    %v833 = vmul.f32 %v819, %v829
    %834 = vst [vmem:[#allocation12] sm:$0xff] %v830
    %835 = vst [vmem:[#allocation12 + $0x8] sm:$0xff] %v831
    %836 = vst [vmem:[#allocation12 + $0x10] sm:$0xff] %v832
    %837 = vst [vmem:[#allocation12 + $0x18] sm:$0xff] %v833
    // Predicated region
    $region58: #{tpu_custom_call.1} parent=1 // pred_check
      _
    $region59: #{tpu_custom_call.1} parent=1 // pred_check_branch
      %839 = sbr.rel (0) target = $region61
    $region60: #{tpu_custom_call.1} parent=1 // pred_region
      %s841 = ssub.s32 512, 512
      %842 = vsyncadd [#allocation4], %s841
      %s843 = sshll.u32 [#allocation11], 4
      %s844 = int_to_ptr.vmem [resolvable:$true] %s843
      %849 = dma.vmem_to_hbm [thread:$0]  %s844, 512, %s9, [#allocation4], 256, 256, 16
    $region61: #{tpu_custom_call.1} parent=1 // pred_fallthru
      _
    // Predicated region
    $region62: #{tpu_custom_call.1} parent=1 // pred_check
      _
    $region63: #{tpu_custom_call.1} parent=1 // pred_check_branch
      %851 = sbr.rel (0) target = $region65
    $region64: #{tpu_custom_call.1} parent=1 // pred_region
      %s853 = ssub.s32 512, 512
      %854 = vsyncadd [#allocation13], %s853
      %s855 = sshll.u32 [#allocation12], 4
      %s856 = int_to_ptr.vmem [resolvable:$true] %s855
      %861 = dma.vmem_to_hbm [thread:$0]  %s856, 512, %s10, [#allocation13], 256, 256, 16
    $region65: #{tpu_custom_call.1} parent=1 // pred_fallthru
      _
    // Predicated region
    $region66: #{tpu_custom_call.1} parent=1 // pred_check
      _
    $region67: #{tpu_custom_call.1} parent=1 // pred_check_branch
      %863 = sbr.rel (0) target = $region69
    $region68: #{tpu_custom_call.1} parent=1 // pred_region
      %864 = dma.done [#allocation4], 512
    $region69: #{tpu_custom_call.1} parent=1 // pred_fallthru
      _
    // Predicated region
    $region70: #{tpu_custom_call.1} parent=1 // pred_check
      _
    $region71: #{tpu_custom_call.1} parent=1 // pred_check_branch
      %866 = sbr.rel (0) target = $region73
    $region72: #{tpu_custom_call.1} parent=1 // pred_region
      %867 = dma.done [#allocation13], 512
    $region73: #{tpu_custom_call.1} parent=1 // pred_fallthru
      _
    %868 = vsyncpa [#allocation3], 1
    %869 = vsyncpa [#allocation6], 1
    %870 = vsyncpa [#allocation9], 1
    %871 = vsyncpa [#allocation4], 1
    %872 = vsyncpa [#allocation13], 1

// kernel: tpu_custom_call.1
$region0: #{tpu_custom_call.1}
  #allocation0 [shape = 'u32[]', space=smem, size = 0x4, offset = 0x4, fixed_abs, tag = 'smem constant byte address 0x4 - core index']
  #allocation1 [shape = 'u32[144,128]{1,0:T(1,128)}', space=vmem, size = 0x12000, scoped, tag = 'internal scratch']
  %s0 = inlined_call_operand.hbm [shape: bf16[16,256], index: 0, kind: input, shape index: {}]
  %s1 = inlined_call_operand.hbm [shape: bf16[256,128], index: 1, kind: input, shape index: {}]
  %s2 = inlined_call_operand.vmem [shape: f32[1,128], index: 2, kind: input, shape index: {}]
  %s3 = inlined_call_operand.hbm [shape: bf16[128,128], index: 3, kind: input, shape index: {}]
  %s4 = inlined_call_operand.vmem [shape: f32[1,128], index: 4, kind: input, shape index: {}]
  %s5 = inlined_call_operand.hbm [shape: bf16[128,256], index: 5, kind: input, shape index: {}]
  %s6 = inlined_call_operand.vmem [shape: f32[1,256], index: 6, kind: input, shape index: {}]
  %s7 = inlined_call_operand.hbm [shape: bf16[128,256], index: 7, kind: input, shape index: {}]
  %s8 = inlined_call_operand.vmem [shape: f32[1,256], index: 8, kind: input, shape index: {}]
  %s9 = inlined_call_operand.hbm [shape: f32[16,256], index: 9, kind: output, shape index: {0}]
  %s10 = inlined_call_operand.hbm [shape: f32[16,256], index: 10, kind: output, shape index: {1}]
  %11 = xla_tuple %s9, %s10
  %s12 = sld [smem:[#allocation0]]
  $region74: #{tpu_custom_call.1} parent=0
    _
  %s14 = ssub.s32 1, %s12
  %s15 = scalar_select 0, %s14, %s12
  $region1: #{tpu_custom_call.1} parent=0
    #allocation2 [shape = 'u8[8192]{0}', space=vmem, size = 0x2000, scoped, tag = 'input window, operand 0, single buffered']
    #allocation3 [shape = 's32[1]{0}', space=sflag, size = 0x4, scoped, tag = 'scoped memory for tpu_custom_call.1']
    #allocation4 [shape = 's32[1]{0}', space=sflag, size = 0x4, scoped, tag = 'scoped memory for tpu_custom_call.1']
    #allocation5 [shape = 'u8[65536]{0}', space=vmem, size = 0x10000, scoped, tag = 'input window, operand 1, single buffered']
    #allocation6 [shape = 's32[1]{0}', space=sflag, size = 0x4, scoped, tag = 'scoped memory for tpu_custom_call.1']
    #allocation7 [shape = 'u8[32768]{0}', space=vmem, size = 0x8000, scoped, tag = 'input window, operand 3, single buffered']
    #allocation8 [shape = 'u8[65536]{0}', space=vmem, size = 0x10000, scoped, tag = 'input window, operand 5, single buffered']
    #allocation9 [shape = 's32[1]{0}', space=sflag, size = 0x4, scoped, tag = 'scoped memory for tpu_custom_call.1']
    #allocation10 [shape = 'u8[65536]{0}', space=vmem, size = 0x10000, scoped, tag = 'input window, operand 7, single buffered']
    #allocation11 [shape = 'u8[16384]{0}', space=vmem, size = 0x4000, scoped, tag = 'output window, operand 0, single buffered']
    #allocation12 [shape = 'u8[16384]{0}', space=vmem, size = 0x4000, scoped, tag = 'output window, operand 1, single buffered']
    #allocation13 [shape = 's32[1]{0}', space=sflag, size = 0x4, scoped, tag = 'scoped memory for tpu_custom_call.1']
    %16 = vsyncpa [#allocation3], 0
    %17 = vsyncpa [#allocation6], 0
    %18 = vsyncpa [#allocation9], 0
    %19 = vsyncpa [#allocation4], 0
    %20 = vsyncpa [#allocation13], 0
    // Predicated region
    $region2: #{tpu_custom_call.1} parent=1 // pred_check
      _
    $region3: #{tpu_custom_call.1} parent=1 // pred_check_branch
      %22 = sbr.rel (0) target = $region5
    $region4: #{tpu_custom_call.1} parent=1 // pred_region
      %s24 = ssub.s32 256, 256
      %25 = vsyncadd [#allocation3], %s24
      %s26 = sshll.u32 [#allocation2], 4
      %s27 = int_to_ptr.vmem [resolvable:$true] %s26
      %32 = dma.hbm_to_vmem [thread:$0]  %s0, 256, %s27, [#allocation3], 128, 128, 8
    $region5: #{tpu_custom_call.1} parent=1 // pred_fallthru
      _
    // Predicated region
    $region6: #{tpu_custom_call.1} parent=1 // pred_check
      _
    $region7: #{tpu_custom_call.1} parent=1 // pred_check_branch
      %34 = sbr.rel (0) target = $region9
    $region8: #{tpu_custom_call.1} parent=1 // pred_region
      %s36 = ssub.s32 2048, 2048
      %37 = vsyncadd [#allocation6], %s36
      %s38 = sshll.u32 [#allocation5], 4
      %s39 = int_to_ptr.vmem [resolvable:$true] %s38
      %44 = dma.hbm_to_vmem [thread:$0]  %s1, 2048, %s39, [#allocation6], 64, 64, 4
    $region9: #{tpu_custom_call.1} parent=1 // pred_fallthru
      _
    // Predicated region
    $region10: #{tpu_custom_call.1} parent=1 // pred_check
      _
    $region11: #{tpu_custom_call.1} parent=1 // pred_check_branch
      %46 = sbr.rel (0) target = $region13
    $region12: #{tpu_custom_call.1} parent=1 // pred_region
      _
    $region13: #{tpu_custom_call.1} parent=1 // pred_fallthru
      _
    // Predicated region
    $region14: #{tpu_custom_call.1} parent=1 // pred_check
      _
    $region15: #{tpu_custom_call.1} parent=1 // pred_check_branch
      %48 = sbr.rel (0) target = $region17
    $region16: #{tpu_custom_call.1} parent=1 // pred_region
      %s50 = ssub.s32 1024, 1024
      %51 = vsyncadd [#allocation6], %s50
      %s52 = sshll.u32 [#allocation7], 4
      %s53 = int_to_ptr.vmem [resolvable:$true] %s52
      %58 = dma.hbm_to_vmem [thread:$0]  %s3, 1024, %s53, [#allocation6], 64, 64, 4
    $region17: #{tpu_custom_call.1} parent=1 // pred_fallthru
      _
    // Predicated region
    $region18: #{tpu_custom_call.1} parent=1 // pred_check
      _
    $region19: #{tpu_custom_call.1} parent=1 // pred_check_branch
      %60 = sbr.rel (0) target = $region21
    $region20: #{tpu_custom_call.1} parent=1 // pred_region
      _
    $region21: #{tpu_custom_call.1} parent=1 // pred_fallthru
      _
    // Predicated region
    $region22: #{tpu_custom_call.1} parent=1 // pred_check
      _
    $region23: #{tpu_custom_call.1} parent=1 // pred_check_branch
      %62 = sbr.rel (0) target = $region25
    $region24: #{tpu_custom_call.1} parent=1 // pred_region
      %s64 = ssub.s32 2048, 2048
      %65 = vsyncadd [#allocation9], %s64
      %s66 = sshll.u32 [#allocation8], 4
      %s67 = int_to_ptr.vmem [resolvable:$true] %s66
      %72 = dma.hbm_to_vmem [thread:$0]  %s5, 2048, %s67, [#allocation9], 128, 128, 8
    $region25: #{tpu_custom_call.1} parent=1 // pred_fallthru
      _
    // Predicated region
    $region26: #{tpu_custom_call.1} parent=1 // pred_check
      _
    $region27: #{tpu_custom_call.1} parent=1 // pred_check_branch
      %74 = sbr.rel (0) target = $region29
    $region28: #{tpu_custom_call.1} parent=1 // pred_region
      _
    $region29: #{tpu_custom_call.1} parent=1 // pred_fallthru
      _
    // Predicated region
    $region30: #{tpu_custom_call.1} parent=1 // pred_check
      _
    $region31: #{tpu_custom_call.1} parent=1 // pred_check_branch
      %76 = sbr.rel (0) target = $region33
    $region32: #{tpu_custom_call.1} parent=1 // pred_region
      %s78 = ssub.s32 2048, 2048
      %79 = vsyncadd [#allocation9], %s78
      %s80 = sshll.u32 [#allocation10], 4
      %s81 = int_to_ptr.vmem [resolvable:$true] %s80
      %86 = dma.hbm_to_vmem [thread:$0]  %s7, 2048, %s81, [#allocation9], 128, 128, 8
    $region33: #{tpu_custom_call.1} parent=1 // pred_fallthru
      _
    // Predicated region
    $region34: #{tpu_custom_call.1} parent=1 // pred_check
      _
    $region35: #{tpu_custom_call.1} parent=1 // pred_check_branch
      %88 = sbr.rel (0) target = $region37
    $region36: #{tpu_custom_call.1} parent=1 // pred_region
      _
    $region37: #{tpu_custom_call.1} parent=1 // pred_fallthru
      _
    // Predicated region
    $region38: #{tpu_custom_call.1} parent=1 // pred_check
      _
    $region39: #{tpu_custom_call.1} parent=1 // pred_check_branch
      %90 = sbr.rel (0) target = $region41
    $region40: #{tpu_custom_call.1} parent=1 // pred_region
      %91 = dma.done [#allocation3], 256
    $region41: #{tpu_custom_call.1} parent=1 // pred_fallthru
      _
    // Predicated region
    $region42: #{tpu_custom_call.1} parent=1 // pred_check
      _
    $region43: #{tpu_custom_call.1} parent=1 // pred_check_branch
      %93 = sbr.rel (0) target = $region45
    $region44: #{tpu_custom_call.1} parent=1 // pred_region
      %94 = dma.done [#allocation6], 2048
    $region45: #{tpu_custom_call.1} parent=1 // pred_fallthru
      _
    // Predicated region
    $region46: #{tpu_custom_call.1} parent=1 // pred_check
      _
    $region47: #{tpu_custom_call.1} parent=1 // pred_check_branch
      %96 = sbr.rel (0) target = $region49
    $region48: #{tpu_custom_call.1} parent=1 // pred_region
      %97 = dma.done [#allocation6], 1024
    $region49: #{tpu_custom_call.1} parent=1 // pred_fallthru
      _
    // Predicated region
    $region50: #{tpu_custom_call.1} parent=1 // pred_check
      _
    $region51: #{tpu_custom_call.1} parent=1 // pred_check_branch
      %99 = sbr.rel (0) target = $region53
    $region52: #{tpu_custom_call.1} parent=1 // pred_region
      %100 = dma.done [#allocation9], 2048
    $region53: #{tpu_custom_call.1} parent=1 // pred_fallthru
      _
    // Predicated region
    $region54: #{tpu_custom_call.1} parent=1 // pred_check
      _
    $region55: #{tpu_custom_call.1} parent=1 // pred_check_branch
      %102 = sbr.rel (0) target = $region57
    $region56: #{tpu_custom_call.1} parent=1 // pred_region
      %103 = dma.done [#allocation9], 2048
    $region57: #{tpu_custom_call.1} parent=1 // pred_fallthru
      _
    %v105 = vld [vmem:[#allocation2] sm:$0xff]
    %v106 = vld [vmem:[#allocation2 + $0x8] sm:$0xff]
    %v107 = vld [vmem:[#allocation5] sm:$0xf]
    %v108 = vld [vmem:[#allocation5 + $0x4] sm:$0xf]
    %v109 = vld [vmem:[#allocation5 + $0x8] sm:$0xf]
    %v110 = vld [vmem:[#allocation5 + $0xc] sm:$0xf]
    %v111 = vld [vmem:[#allocation5 + $0x10] sm:$0xf]
    %v112 = vld [vmem:[#allocation5 + $0x14] sm:$0xf]
    %v113 = vld [vmem:[#allocation5 + $0x18] sm:$0xf]
    %v114 = vld [vmem:[#allocation5 + $0x1c] sm:$0xf]
    %v115 = vld [vmem:[#allocation5 + $0x20] sm:$0xf]
    %v116 = vld [vmem:[#allocation5 + $0x24] sm:$0xf]
    %v117 = vld [vmem:[#allocation5 + $0x28] sm:$0xf]
    %v118 = vld [vmem:[#allocation5 + $0x2c] sm:$0xf]
    %v119 = vld [vmem:[#allocation5 + $0x30] sm:$0xf]
    %v120 = vld [vmem:[#allocation5 + $0x34] sm:$0xf]
    %v121 = vld [vmem:[#allocation5 + $0x38] sm:$0xf]
    %v122 = vld [vmem:[#allocation5 + $0x3c] sm:$0xf]
    %v123 = vld [vmem:[#allocation5 + $0x40] sm:$0xf]
    %v124 = vld [vmem:[#allocation5 + $0x44] sm:$0xf]
    %v125 = vld [vmem:[#allocation5 + $0x48] sm:$0xf]
    %v126 = vld [vmem:[#allocation5 + $0x4c] sm:$0xf]
    %v127 = vld [vmem:[#allocation5 + $0x50] sm:$0xf]
    %v128 = vld [vmem:[#allocation5 + $0x54] sm:$0xf]
    %v129 = vld [vmem:[#allocation5 + $0x58] sm:$0xf]
    %v130 = vld [vmem:[#allocation5 + $0x5c] sm:$0xf]
    %v131 = vld [vmem:[#allocation5 + $0x60] sm:$0xf]
    %v132 = vld [vmem:[#allocation5 + $0x64] sm:$0xf]
    %v133 = vld [vmem:[#allocation5 + $0x68] sm:$0xf]
    %v134 = vld [vmem:[#allocation5 + $0x6c] sm:$0xf]
    %v135 = vld [vmem:[#allocation5 + $0x70] sm:$0xf]
    %v136 = vld [vmem:[#allocation5 + $0x74] sm:$0xf]
    %v137 = vld [vmem:[#allocation5 + $0x78] sm:$0xf]
    %v138 = vld [vmem:[#allocation5 + $0x7c] sm:$0xf]
    %v139 = vld [vmem:[%s2] sm:$0x1]
    %v141 = vlaneseq
    %v142 = vshrl.u32 %v141, 7
    %v143 = vsub.s32 0, %v142
    %v144 = vrot.slane %v139, %v143
    %v148 = vunpack.c.l.b16 %v105
    %v149 = vunpack.c.h.b16 %v105
    %v150 = vunpack.c.l.b16 %v106
    %v151 = vunpack.c.h.b16 %v106
    %v152 = vpack.c.b16 %v150, %v148
    %v153 = vpack.c.b16 %v151, %v149
    %v188 = vunpack.c.l.b16 %v107
    %v189 = vunpack.c.l.b16 %v108
    %v190 = vunpack.c.l.b16 %v109
    %v191 = vunpack.c.l.b16 %v110
    %v192 = vunpack.c.l.b16 %v111
    %v193 = vunpack.c.l.b16 %v112
    %v194 = vunpack.c.l.b16 %v113
    %v195 = vunpack.c.l.b16 %v114
    %v196 = vunpack.c.l.b16 %v115
    %v197 = vunpack.c.l.b16 %v116
    %v198 = vunpack.c.l.b16 %v117
    %v199 = vunpack.c.l.b16 %v118
    %v200 = vunpack.c.l.b16 %v119
    %v201 = vunpack.c.l.b16 %v120
    %v202 = vunpack.c.l.b16 %v121
    %v203 = vunpack.c.l.b16 %v122
    %v204 = vunpack.c.l.b16 %v123
    %v205 = vunpack.c.l.b16 %v124
    %v206 = vunpack.c.l.b16 %v125
    %v207 = vunpack.c.l.b16 %v126
    %v208 = vunpack.c.l.b16 %v127
    %v209 = vunpack.c.l.b16 %v128
    %v210 = vunpack.c.l.b16 %v129
    %v211 = vunpack.c.l.b16 %v130
    %v212 = vunpack.c.l.b16 %v131
    %v213 = vunpack.c.l.b16 %v132
    %v214 = vunpack.c.l.b16 %v133
    %v215 = vunpack.c.l.b16 %v134
    %v216 = vunpack.c.l.b16 %v135
    %v217 = vunpack.c.l.b16 %v136
    %v218 = vunpack.c.l.b16 %v137
    %v219 = vunpack.c.l.b16 %v138
    %v220 = vpack.c.b16 %v189, %v188
    %v221 = vpack.c.b16 %v191, %v190
    %v222 = vpack.c.b16 %v193, %v192
    %v223 = vpack.c.b16 %v195, %v194
    %v224 = vpack.c.b16 %v197, %v196
    %v225 = vpack.c.b16 %v199, %v198
    %v226 = vpack.c.b16 %v201, %v200
    %v227 = vpack.c.b16 %v203, %v202
    %v228 = vpack.c.b16 %v205, %v204
    %v229 = vpack.c.b16 %v207, %v206
    %v230 = vpack.c.b16 %v209, %v208
    %v231 = vpack.c.b16 %v211, %v210
    %v232 = vpack.c.b16 %v213, %v212
    %v233 = vpack.c.b16 %v215, %v214
    %v234 = vpack.c.b16 %v217, %v216
    %v235 = vpack.c.b16 %v219, %v218
    %252 = vmatprep.subr.bf16.mxu0 0
    %253 = vmatpush1.bf16.msra.mxu0 %v227
    %254 = vmatprep.subr.bf16.mxu0 0
    %255 = vmatpush1.bf16.msra.mxu0 %v226
    %256 = vmatprep.subr.bf16.mxu0 0
    %257 = vmatpush1.bf16.msra.mxu0 %v225
    %258 = vmatprep.subr.bf16.mxu0 0
    %259 = vmatpush1.bf16.msra.mxu0 %v224
    %260 = vmatprep.subr.bf16.mxu0 0
    %261 = vmatpush1.bf16.msra.mxu0 %v223
    %262 = vmatprep.subr.bf16.mxu0 0
    %263 = vmatpush1.bf16.msra.mxu0 %v222
    %264 = vmatprep.subr.bf16.mxu0 0
    %265 = vmatpush1.bf16.msra.mxu0 %v221
    %266 = vmatprep.subr.bf16.mxu0 0
    %267 = vmatpush1.bf16.msra.mxu0 %v220
    %268 = vmatprep.subr.bf16.mxu0 0
    %269 = vmatpush2.bf16.msra.mxu0 %v235
    %270 = vmatprep.subr.bf16.mxu0 0
    %271 = vmatpush2.bf16.msra.mxu0 %v234
    %272 = vmatprep.subr.bf16.mxu0 0
    %273 = vmatpush2.bf16.msra.mxu0 %v233
    %274 = vmatprep.subr.bf16.mxu0 0
    %275 = vmatpush2.bf16.msra.mxu0 %v232
    %276 = vmatprep.subr.bf16.mxu0 0
    %277 = vmatpush2.bf16.msra.mxu0 %v231
    %278 = vmatprep.subr.bf16.mxu0 0
    %279 = vmatpush2.bf16.msra.mxu0 %v230
    %280 = vmatprep.subr.bf16.mxu0 0
    %281 = vmatpush2.bf16.msra.mxu0 %v229
    %282 = vmatprep.subr.bf16.mxu0 0
    %283 = vmatpush2.bf16.msra.mxu0 %v228
    %284 = vmatprep.mubr.bf16.mxu0 %v153
    %285 = vmatmul.mubr.bf16.gmra.mxu0 %v152
    %v286 = vpop.f32.mrf.mxu0
    %v287 = vadd.f32 %v144, %v286
    %v288 = vpop.f32.mrf.mxu0
    %v289 = vpop.f32.mrf.mxu0
    %v290 = vadd.f32 %v144, %v289
    %v291 = vpop.f32.mrf.mxu0
    %292 = vdwg.mxu0
    %v293 = vmax.f32 %v287, 0.0
    %v294 = vmax.f32 %v290, 0.0
    %vm295 = vcmp.ne.f32.partialorder %v287, %v287
    %vm296 = vcmp.ne.f32.partialorder %v290, %v290
    %v297 = vadd.f32 %v287, 0.0
    %v298 = vadd.f32 %v290, 0.0
    %v299 = vand.u32 2147483647, %v287
    %v300 = vand.u32 2147483647, %v290
    %v301 = vsub.f32 0.0, %v299
    %v302 = vsub.f32 0.0, %v300
    %v303 = vmul.f32 %v301, 1.442695
    %v304 = vpow.pop %v303
    %v305 = vmul.f32 %v302, 1.442695
    %v306 = vpow.pop %v305
    %v307 = vadd.f32 %v304, 1.0
    %v308 = vlog2.pop %v307
    %v309 = vmul.f32 %v308, 0.6931472
    %v310 = vmul.f32 -0.5, %v304
    %v311 = vadd.f32 %v310, 1.0
    %v312 = vmul.f32 %v311, %v304
    %v313 = vand.u32 2147483647, %v304
    %vm314 = vcmp.lt.f32.partialorder %v313, 0.0004427343
    %v315 = vsel %vm314, %v312, %v309
    %v316 = vadd.f32 %v306, 1.0
    %v317 = vlog2.pop %v316
    %v318 = vmul.f32 %v317, 0.6931472
    %v319 = vmul.f32 -0.5, %v306
    %v320 = vadd.f32 %v319, 1.0
    %v321 = vmul.f32 %v320, %v306
    %v322 = vand.u32 2147483647, %v306
    %vm323 = vcmp.lt.f32.partialorder %v322, 0.0004427343
    %v324 = vsel %vm323, %v321, %v318
    %v325 = vadd.f32 %v293, %v315
    %v326 = vadd.f32 %v294, %v324
    %v327 = vsel %vm295, %v297, %v325
    %v328 = vsel %vm296, %v298, %v326
    %v329 = vpack.c.bf16 %v328, %v327
    %v330 = vld [vmem:[#allocation7] sm:$0xf]
    %v331 = vld [vmem:[#allocation7 + $0x4] sm:$0xf]
    %v332 = vld [vmem:[#allocation7 + $0x8] sm:$0xf]
    %v333 = vld [vmem:[#allocation7 + $0xc] sm:$0xf]
    %v334 = vld [vmem:[#allocation7 + $0x10] sm:$0xf]
    %v335 = vld [vmem:[#allocation7 + $0x14] sm:$0xf]
    %v336 = vld [vmem:[#allocation7 + $0x18] sm:$0xf]
    %v337 = vld [vmem:[#allocation7 + $0x1c] sm:$0xf]
    %v338 = vld [vmem:[#allocation7 + $0x20] sm:$0xf]
    %v339 = vld [vmem:[#allocation7 + $0x24] sm:$0xf]
    %v340 = vld [vmem:[#allocation7 + $0x28] sm:$0xf]
    %v341 = vld [vmem:[#allocation7 + $0x2c] sm:$0xf]
    %v342 = vld [vmem:[#allocation7 + $0x30] sm:$0xf]
    %v343 = vld [vmem:[#allocation7 + $0x34] sm:$0xf]
    %v344 = vld [vmem:[#allocation7 + $0x38] sm:$0xf]
    %v345 = vld [vmem:[#allocation7 + $0x3c] sm:$0xf]
    %v346 = vld [vmem:[%s4] sm:$0x1]
    %v348 = vlaneseq
    %v349 = vshrl.u32 %v348, 7
    %v350 = vsub.s32 0, %v349
    %v351 = vrot.slane %v346, %v350
    %v369 = vunpack.c.l.b16 %v330
    %v370 = vunpack.c.l.b16 %v331
    %v371 = vunpack.c.l.b16 %v332
    %v372 = vunpack.c.l.b16 %v333
    %v373 = vunpack.c.l.b16 %v334
    %v374 = vunpack.c.l.b16 %v335
    %v375 = vunpack.c.l.b16 %v336
    %v376 = vunpack.c.l.b16 %v337
    %v377 = vunpack.c.l.b16 %v338
    %v378 = vunpack.c.l.b16 %v339
    %v379 = vunpack.c.l.b16 %v340
    %v380 = vunpack.c.l.b16 %v341
    %v381 = vunpack.c.l.b16 %v342
    %v382 = vunpack.c.l.b16 %v343
    %v383 = vunpack.c.l.b16 %v344
    %v384 = vunpack.c.l.b16 %v345
    %v385 = vpack.c.b16 %v370, %v369
    %v386 = vpack.c.b16 %v372, %v371
    %v387 = vpack.c.b16 %v374, %v373
    %v388 = vpack.c.b16 %v376, %v375
    %v389 = vpack.c.b16 %v378, %v377
    %v390 = vpack.c.b16 %v380, %v379
    %v391 = vpack.c.b16 %v382, %v381
    %v392 = vpack.c.b16 %v384, %v383
    %401 = vmatprep.subr.bf16.mxu0 0
    %402 = vmatpush1.bf16.msra.mxu0 %v392
    %403 = vmatprep.subr.bf16.mxu0 0
    %404 = vmatpush1.bf16.msra.mxu0 %v391
    %405 = vmatprep.subr.bf16.mxu0 0
    %406 = vmatpush1.bf16.msra.mxu0 %v390
    %407 = vmatprep.subr.bf16.mxu0 0
    %408 = vmatpush1.bf16.msra.mxu0 %v389
    %409 = vmatprep.subr.bf16.mxu0 0
    %410 = vmatpush1.bf16.msra.mxu0 %v388
    %411 = vmatprep.subr.bf16.mxu0 0
    %412 = vmatpush1.bf16.msra.mxu0 %v387
    %413 = vmatprep.subr.bf16.mxu0 0
    %414 = vmatpush1.bf16.msra.mxu0 %v386
    %415 = vmatprep.subr.bf16.mxu0 0
    %416 = vmatpush1.bf16.msra.mxu0 %v385
    %417 = vmatprep.subr.bf16.mxu0 0
    %418 = vmatpush2.bf16.msra.mxu0 0
    %419 = vmatprep.subr.bf16.mxu0 0
    %420 = vmatpush2.bf16.msra.mxu0 0
    %421 = vmatprep.subr.bf16.mxu0 0
    %422 = vmatpush2.bf16.msra.mxu0 0
    %423 = vmatprep.subr.bf16.mxu0 0
    %424 = vmatpush2.bf16.msra.mxu0 0
    %425 = vmatprep.subr.bf16.mxu0 0
    %426 = vmatpush2.bf16.msra.mxu0 0
    %427 = vmatprep.subr.bf16.mxu0 0
    %428 = vmatpush2.bf16.msra.mxu0 0
    %429 = vmatprep.subr.bf16.mxu0 0
    %430 = vmatpush2.bf16.msra.mxu0 0
    %431 = vmatprep.subr.bf16.mxu0 0
    %432 = vmatpush2.bf16.msra.mxu0 0
    %433 = vmatprep.mubr.bf16.mxu0 0
    %434 = vmatmul.mubr.bf16.gmra.mxu0 %v329
    %v435 = vpop.f32.mrf.mxu0
    %v436 = vadd.f32 %v351, %v435
    %v437 = vpop.f32.mrf.mxu0
    %v438 = vpop.f32.mrf.mxu0
    %v439 = vadd.f32 %v351, %v438
    %v440 = vpop.f32.mrf.mxu0
    %441 = vdwg.mxu0
    %v442 = vmax.f32 %v436, 0.0
    %v443 = vmax.f32 %v439, 0.0
    %vm444 = vcmp.ne.f32.partialorder %v436, %v436
    %vm445 = vcmp.ne.f32.partialorder %v439, %v439
    %v446 = vadd.f32 %v436, 0.0
    %v447 = vadd.f32 %v439, 0.0
    %v448 = vand.u32 2147483647, %v436
    %v449 = vand.u32 2147483647, %v439
    %v450 = vsub.f32 0.0, %v448
    %v451 = vsub.f32 0.0, %v449
    %v452 = vmul.f32 %v450, 1.442695
    %v453 = vpow.pop %v452
    %v454 = vmul.f32 %v451, 1.442695
    %v455 = vpow.pop %v454
    %v456 = vadd.f32 %v453, 1.0
    %v457 = vlog2.pop %v456
    %v458 = vmul.f32 %v457, 0.6931472
    %v459 = vmul.f32 -0.5, %v453
    %v460 = vadd.f32 %v459, 1.0
    %v461 = vmul.f32 %v460, %v453
    %v462 = vand.u32 2147483647, %v453
    %vm463 = vcmp.lt.f32.partialorder %v462, 0.0004427343
    %v464 = vsel %vm463, %v461, %v458
    %v465 = vadd.f32 %v455, 1.0
    %v466 = vlog2.pop %v465
    %v467 = vmul.f32 %v466, 0.6931472
    %v468 = vmul.f32 -0.5, %v455
    %v469 = vadd.f32 %v468, 1.0
    %v470 = vmul.f32 %v469, %v455
    %v471 = vand.u32 2147483647, %v455
    %vm472 = vcmp.lt.f32.partialorder %v471, 0.0004427343
    %v473 = vsel %vm472, %v470, %v467
    %v474 = vadd.f32 %v442, %v464
    %v475 = vadd.f32 %v443, %v473
    %v476 = vsel %vm444, %v446, %v474
    %v477 = vsel %vm445, %v447, %v475
    %v478 = vpack.c.bf16 %v477, %v476
    %v479 = vld [vmem:[#allocation8] sm:$0xff]
    %v480 = vld [vmem:[#allocation8 + $0x8] sm:$0xff]
    %v481 = vld [vmem:[#allocation8 + $0x10] sm:$0xff]
    %v482 = vld [vmem:[#allocation8 + $0x18] sm:$0xff]
    %v483 = vld [vmem:[#allocation8 + $0x20] sm:$0xff]
    %v484 = vld [vmem:[#allocation8 + $0x28] sm:$0xff]
    %v485 = vld [vmem:[#allocation8 + $0x30] sm:$0xff]
    %v486 = vld [vmem:[#allocation8 + $0x38] sm:$0xff]
    %v487 = vld [vmem:[#allocation8 + $0x40] sm:$0xff]
    %v488 = vld [vmem:[#allocation8 + $0x48] sm:$0xff]
    %v489 = vld [vmem:[#allocation8 + $0x50] sm:$0xff]
    %v490 = vld [vmem:[#allocation8 + $0x58] sm:$0xff]
    %v491 = vld [vmem:[#allocation8 + $0x60] sm:$0xff]
    %v492 = vld [vmem:[#allocation8 + $0x68] sm:$0xff]
    %v493 = vld [vmem:[#allocation8 + $0x70] sm:$0xff]
    %v494 = vld [vmem:[#allocation8 + $0x78] sm:$0xff]
    %v495 = vld [vmem:[%s6] sm:$0x3]
    %v497 = vlaneseq
    %v498 = vshrl.u32 %v497, 7
    %v499 = vsub.s32 0, %v498
    %v500 = vrot.slane %v495, %v499
    %v501 = vlaneseq
    %v502 = vshrl.u32 %v501, 7
    %v503 = vsub.s32 1, %v502
    %v504 = vrot.slane %v495, %v503
    %v523 = vunpack.c.l.b16 %v479
    %v524 = vunpack.c.h.b16 %v479
    %v525 = vunpack.c.l.b16 %v480
    %v526 = vunpack.c.h.b16 %v480
    %v527 = vunpack.c.l.b16 %v481
    %v528 = vunpack.c.h.b16 %v481
    %v529 = vunpack.c.l.b16 %v482
    %v530 = vunpack.c.h.b16 %v482
    %v531 = vunpack.c.l.b16 %v483
    %v532 = vunpack.c.h.b16 %v483
    %v533 = vunpack.c.l.b16 %v484
    %v534 = vunpack.c.h.b16 %v484
    %v535 = vunpack.c.l.b16 %v485
    %v536 = vunpack.c.h.b16 %v485
    %v537 = vunpack.c.l.b16 %v486
    %v538 = vunpack.c.h.b16 %v486
    %v539 = vunpack.c.l.b16 %v487
    %v540 = vunpack.c.h.b16 %v487
    %v541 = vunpack.c.l.b16 %v488
    %v542 = vunpack.c.h.b16 %v488
    %v543 = vunpack.c.l.b16 %v489
    %v544 = vunpack.c.h.b16 %v489
    %v545 = vunpack.c.l.b16 %v490
    %v546 = vunpack.c.h.b16 %v490
    %v547 = vunpack.c.l.b16 %v491
    %v548 = vunpack.c.h.b16 %v491
    %v549 = vunpack.c.l.b16 %v492
    %v550 = vunpack.c.h.b16 %v492
    %v551 = vunpack.c.l.b16 %v493
    %v552 = vunpack.c.h.b16 %v493
    %v553 = vunpack.c.l.b16 %v494
    %v554 = vunpack.c.h.b16 %v494
    %v555 = vpack.c.b16 %v525, %v523
    %v556 = vpack.c.b16 %v526, %v524
    %v557 = vpack.c.b16 %v529, %v527
    %v558 = vpack.c.b16 %v530, %v528
    %v559 = vpack.c.b16 %v533, %v531
    %v560 = vpack.c.b16 %v534, %v532
    %v561 = vpack.c.b16 %v537, %v535
    %v562 = vpack.c.b16 %v538, %v536
    %v563 = vpack.c.b16 %v541, %v539
    %v564 = vpack.c.b16 %v542, %v540
    %v565 = vpack.c.b16 %v545, %v543
    %v566 = vpack.c.b16 %v546, %v544
    %v567 = vpack.c.b16 %v549, %v547
    %v568 = vpack.c.b16 %v550, %v548
    %v569 = vpack.c.b16 %v553, %v551
    %v570 = vpack.c.b16 %v554, %v552
    %587 = vmatprep.subr.bf16.mxu0 %v570
    %588 = vmatpush1.bf16.msra.mxu0 %v569
    %589 = vmatprep.subr.bf16.mxu0 %v568
    %590 = vmatpush1.bf16.msra.mxu0 %v567
    %591 = vmatprep.subr.bf16.mxu0 %v566
    %592 = vmatpush1.bf16.msra.mxu0 %v565
    %593 = vmatprep.subr.bf16.mxu0 %v564
    %594 = vmatpush1.bf16.msra.mxu0 %v563
    %595 = vmatprep.subr.bf16.mxu0 %v562
    %596 = vmatpush1.bf16.msra.mxu0 %v561
    %597 = vmatprep.subr.bf16.mxu0 %v560
    %598 = vmatpush1.bf16.msra.mxu0 %v559
    %599 = vmatprep.subr.bf16.mxu0 %v558
    %600 = vmatpush1.bf16.msra.mxu0 %v557
    %601 = vmatprep.subr.bf16.mxu0 %v556
    %602 = vmatpush1.bf16.msra.mxu0 %v555
    %603 = vmatprep.subr.bf16.mxu0 0
    %604 = vmatpush2.bf16.msra.mxu0 0
    %605 = vmatprep.subr.bf16.mxu0 0
    %606 = vmatpush2.bf16.msra.mxu0 0
    %607 = vmatprep.subr.bf16.mxu0 0
    %608 = vmatpush2.bf16.msra.mxu0 0
    %609 = vmatprep.subr.bf16.mxu0 0
    %610 = vmatpush2.bf16.msra.mxu0 0
    %611 = vmatprep.subr.bf16.mxu0 0
    %612 = vmatpush2.bf16.msra.mxu0 0
    %613 = vmatprep.subr.bf16.mxu0 0
    %614 = vmatpush2.bf16.msra.mxu0 0
    %615 = vmatprep.subr.bf16.mxu0 0
    %616 = vmatpush2.bf16.msra.mxu0 0
    %617 = vmatprep.subr.bf16.mxu0 0
    %618 = vmatpush2.bf16.msra.mxu0 0
    %619 = vmatprep.mubr.bf16.mxu0 0
    %620 = vmatmul.mubr.bf16.gmra.mxu0 %v478
    %v621 = vpop.f32.mrf.mxu0
    %v622 = vadd.f32 %v500, %v621
    %v623 = vpop.f32.mrf.mxu0
    %v624 = vadd.f32 %v504, %v623
    %v625 = vpop.f32.mrf.mxu0
    %v626 = vadd.f32 %v500, %v625
    %v627 = vpop.f32.mrf.mxu0
    %v628 = vadd.f32 %v504, %v627
    %629 = vdwg.mxu0
    %v630 = vmul.f32 %v624, 0.5
    %v631 = vmul.f32 %v628, 0.5
    %v632 = vmul.f32 %v630, 1.442695
    %v633 = vpow.pop %v632
    %v634 = vmul.f32 %v631, 1.442695
    %v635 = vpow.pop %v634
    %636 = vst [vmem:[#allocation11] sm:$0xff] %v622
    %637 = vst [vmem:[#allocation11 + $0x10] sm:$0xff] %v626
    %638 = vst [vmem:[#allocation11 + $0x8] sm:$0xff] %v633
    %639 = vst [vmem:[#allocation11 + $0x18] sm:$0xff] %v635
    %v640 = vmul.f32 %v633, 0.5
    %v641 = vmul.f32 %v635, 0.5
    %v642 = vmul.f32 %v640, %v633
    %v643 = vmul.f32 %v641, %v635
    %v644 = vadd.f32 %v622, %v642
    %v645 = vadd.f32 %v626, %v643
    %v646 = vmul.f32 %v644, 1.442695
    %v647 = vpow.pop %v646
    %v648 = vmul.f32 %v645, 1.442695
    %v649 = vpow.pop %v648
    %v650 = vpack.c.bf16 %v649, %v647
    %v651 = vld [vmem:[#allocation10] sm:$0xff]
    %v652 = vld [vmem:[#allocation10 + $0x8] sm:$0xff]
    %v653 = vld [vmem:[#allocation10 + $0x10] sm:$0xff]
    %v654 = vld [vmem:[#allocation10 + $0x18] sm:$0xff]
    %v655 = vld [vmem:[#allocation10 + $0x20] sm:$0xff]
    %v656 = vld [vmem:[#allocation10 + $0x28] sm:$0xff]
    %v657 = vld [vmem:[#allocation10 + $0x30] sm:$0xff]
    %v658 = vld [vmem:[#allocation10 + $0x38] sm:$0xff]
    %v659 = vld [vmem:[#allocation10 + $0x40] sm:$0xff]
    %v660 = vld [vmem:[#allocation10 + $0x48] sm:$0xff]
    %v661 = vld [vmem:[#allocation10 + $0x50] sm:$0xff]
    %v662 = vld [vmem:[#allocation10 + $0x58] sm:$0xff]
    %v663 = vld [vmem:[#allocation10 + $0x60] sm:$0xff]
    %v664 = vld [vmem:[#allocation10 + $0x68] sm:$0xff]
    %v665 = vld [vmem:[#allocation10 + $0x70] sm:$0xff]
    %v666 = vld [vmem:[#allocation10 + $0x78] sm:$0xff]
    %v667 = vld [vmem:[%s8] sm:$0x3]
    %v669 = vlaneseq
    %v670 = vshrl.u32 %v669, 7
    %v671 = vsub.s32 0, %v670
    %v672 = vrot.slane %v667, %v671
    %v673 = vlaneseq
    %v674 = vshrl.u32 %v673, 7
    %v675 = vsub.s32 1, %v674
    %v676 = vrot.slane %v667, %v675
    %v695 = vunpack.c.l.b16 %v651
    %v696 = vunpack.c.h.b16 %v651
    %v697 = vunpack.c.l.b16 %v652
    %v698 = vunpack.c.h.b16 %v652
    %v699 = vunpack.c.l.b16 %v653
    %v700 = vunpack.c.h.b16 %v653
    %v701 = vunpack.c.l.b16 %v654
    %v702 = vunpack.c.h.b16 %v654
    %v703 = vunpack.c.l.b16 %v655
    %v704 = vunpack.c.h.b16 %v655
    %v705 = vunpack.c.l.b16 %v656
    %v706 = vunpack.c.h.b16 %v656
    %v707 = vunpack.c.l.b16 %v657
    %v708 = vunpack.c.h.b16 %v657
    %v709 = vunpack.c.l.b16 %v658
    %v710 = vunpack.c.h.b16 %v658
    %v711 = vunpack.c.l.b16 %v659
    %v712 = vunpack.c.h.b16 %v659
    %v713 = vunpack.c.l.b16 %v660
    %v714 = vunpack.c.h.b16 %v660
    %v715 = vunpack.c.l.b16 %v661
    %v716 = vunpack.c.h.b16 %v661
    %v717 = vunpack.c.l.b16 %v662
    %v718 = vunpack.c.h.b16 %v662
    %v719 = vunpack.c.l.b16 %v663
    %v720 = vunpack.c.h.b16 %v663
    %v721 = vunpack.c.l.b16 %v664
    %v722 = vunpack.c.h.b16 %v664
    %v723 = vunpack.c.l.b16 %v665
    %v724 = vunpack.c.h.b16 %v665
    %v725 = vunpack.c.l.b16 %v666
    %v726 = vunpack.c.h.b16 %v666
    %v727 = vpack.c.b16 %v697, %v695
    %v728 = vpack.c.b16 %v698, %v696
    %v729 = vpack.c.b16 %v701, %v699
    %v730 = vpack.c.b16 %v702, %v700
    %v731 = vpack.c.b16 %v705, %v703
    %v732 = vpack.c.b16 %v706, %v704
    %v733 = vpack.c.b16 %v709, %v707
    %v734 = vpack.c.b16 %v710, %v708
    %v735 = vpack.c.b16 %v713, %v711
    %v736 = vpack.c.b16 %v714, %v712
    %v737 = vpack.c.b16 %v717, %v715
    %v738 = vpack.c.b16 %v718, %v716
    %v739 = vpack.c.b16 %v721, %v719
    %v740 = vpack.c.b16 %v722, %v720
    %v741 = vpack.c.b16 %v725, %v723
    %v742 = vpack.c.b16 %v726, %v724
    %759 = vmatprep.subr.bf16.mxu0 %v742
    %760 = vmatpush1.bf16.msra.mxu0 %v741
    %761 = vmatprep.subr.bf16.mxu0 %v740
    %762 = vmatpush1.bf16.msra.mxu0 %v739
    %763 = vmatprep.subr.bf16.mxu0 %v738
    %764 = vmatpush1.bf16.msra.mxu0 %v737
    %765 = vmatprep.subr.bf16.mxu0 %v736
    %766 = vmatpush1.bf16.msra.mxu0 %v735
    %767 = vmatprep.subr.bf16.mxu0 %v734
    %768 = vmatpush1.bf16.msra.mxu0 %v733
    %769 = vmatprep.subr.bf16.mxu0 %v732
    %770 = vmatpush1.bf16.msra.mxu0 %v731
    %771 = vmatprep.subr.bf16.mxu0 %v730
    %772 = vmatpush1.bf16.msra.mxu0 %v729
    %773 = vmatprep.subr.bf16.mxu0 %v728
    %774 = vmatpush1.bf16.msra.mxu0 %v727
    %775 = vmatprep.subr.bf16.mxu0 0
    %776 = vmatpush2.bf16.msra.mxu0 0
    %777 = vmatprep.subr.bf16.mxu0 0
    %778 = vmatpush2.bf16.msra.mxu0 0
    %779 = vmatprep.subr.bf16.mxu0 0
    %780 = vmatpush2.bf16.msra.mxu0 0
    %781 = vmatprep.subr.bf16.mxu0 0
    %782 = vmatpush2.bf16.msra.mxu0 0
    %783 = vmatprep.subr.bf16.mxu0 0
    %784 = vmatpush2.bf16.msra.mxu0 0
    %785 = vmatprep.subr.bf16.mxu0 0
    %786 = vmatpush2.bf16.msra.mxu0 0
    %787 = vmatprep.subr.bf16.mxu0 0
    %788 = vmatpush2.bf16.msra.mxu0 0
    %789 = vmatprep.subr.bf16.mxu0 0
    %790 = vmatpush2.bf16.msra.mxu0 0
    %791 = vmatprep.mubr.bf16.mxu0 0
    %792 = vmatmul.mubr.bf16.gmra.mxu0 %v650
    %v793 = vpop.f32.mrf.mxu0
    %v794 = vadd.f32 %v672, %v793
    %v795 = vpop.f32.mrf.mxu0
    %v796 = vadd.f32 %v676, %v795
    %v797 = vpop.f32.mrf.mxu0
    %v798 = vadd.f32 %v672, %v797
    %v799 = vpop.f32.mrf.mxu0
    %v800 = vadd.f32 %v676, %v799
    %801 = vdwg.mxu0
    %v802 = vmax.f32 %v794, %v796
    %803 = vmax.xlane.f32.xlu0 %v802
    %v804 = vpop.xlane.xlu0 %803
    %v805 = vmax.f32 %v798, %v800
    %806 = vmax.xlane.f32.xlu0 %v805
    %v807 = vpop.xlane.xlu0 %806
    %v808 = vsub.f32 %v794, %v804
    %v809 = vsub.f32 %v796, %v804
    %v810 = vsub.f32 %v798, %v807
    %v811 = vsub.f32 %v800, %v807
    %v812 = vmul.f32 %v808, 1.442695
    %v813 = vpow.pop %v812
    %v814 = vmul.f32 %v809, 1.442695
    %v815 = vpow.pop %v814
    %v816 = vmul.f32 %v810, 1.442695
    %v817 = vpow.pop %v816
    %v818 = vmul.f32 %v811, 1.442695
    %v819 = vpow.pop %v818
    %v820 = vadd.f32 %v813, %v815
    %821 = vadd.xlane.f32.xlu0 %v820
    %v822 = vpop.xlane.xlu0 %821
    %v823 = vadd.f32 %v817, %v819
    %824 = vadd.xlane.f32.xlu0 %v823
    %v825 = vpop.xlane.xlu0 %824
    %v826 = vrcp.pop %v822
    %v827 = vmul.f32 1.0, %v826
    %v828 = vrcp.pop %v825
    %v829 = vmul.f32 1.0, %v828
    %v830 = vmul.f32 %v813, %v827
    %v831 = vmul.f32 %v815, %v827
    %v832 = vmul.f32 %v817, %v829
    %v833 = vmul.f32 %v819, %v829
    %834 = vst [vmem:[#allocation12] sm:$0xff] %v830
    %835 = vst [vmem:[#allocation12 + $0x8] sm:$0xff] %v831
    %836 = vst [vmem:[#allocation12 + $0x10] sm:$0xff] %v832
    %837 = vst [vmem:[#allocation12 + $0x18] sm:$0xff] %v833
    // Predicated region
    $region58: #{tpu_custom_call.1} parent=1 // pred_check
      _
    $region59: #{tpu_custom_call.1} parent=1 // pred_check_branch
      %839 = sbr.rel (0) target = $region61
    $region60: #{tpu_custom_call.1} parent=1 // pred_region
      %s841 = ssub.s32 512, 512
      %842 = vsyncadd [#allocation4], %s841
      %s843 = sshll.u32 [#allocation11], 4
      %s844 = int_to_ptr.vmem [resolvable:$true] %s843
      %849 = dma.vmem_to_hbm [thread:$0]  %s844, 512, %s9, [#allocation4], 256, 256, 16
    $region61: #{tpu_custom_call.1} parent=1 // pred_fallthru
      _
    // Predicated region
    $region62: #{tpu_custom_call.1} parent=1 // pred_check
      _
    $region63: #{tpu_custom_call.1} parent=1 // pred_check_branch
      %851 = sbr.rel (0) target = $region65
    $region64: #{tpu_custom_call.1} parent=1 // pred_region
      %s853 = ssub.s32 512, 512
      %854 = vsyncadd [#allocation13], %s853
      %s855 = sshll.u32 [#allocation12], 4
      %s856 = int_to_ptr.vmem [resolvable:$true] %s855
      %861 = dma.vmem_to_hbm [thread:$0]  %s856, 512, %s10, [#allocation13], 256, 256, 16
    $region65: #{tpu_custom_call.1} parent=1 // pred_fallthru
      _
    // Predicated region
    $region66: #{tpu_custom_call.1} parent=1 // pred_check
      _
    $region67: #{tpu_custom_call.1} parent=1 // pred_check_branch
      %863 = sbr.rel (0) target = $region69
    $region68: #{tpu_custom_call.1} parent=1 // pred_region
      %864 = dma.done [#allocation4], 512
    $region69: #{tpu_custom_call.1} parent=1 // pred_fallthru
      _
    // Predicated region
    $region70: #{tpu_custom_call.1} parent=1 // pred_check
      _
    $region71: #{tpu_custom_call.1} parent=1 // pred_check_branch
      %866 = sbr.rel (0) target = $region73
    $region72: #{tpu_custom_call.1} parent=1 // pred_region
      %867 = dma.done [#allocation13], 512
    $region73: #{tpu_custom_call.1} parent=1 // pred_fallthru
      _
    %868 = vsyncpa [#allocation3], 1
    %869 = vsyncpa [#allocation6], 1
    %870 = vsyncpa [#allocation9], 1
    %871 = vsyncpa [#allocation4], 1
    %872 = vsyncpa [#allocation13], 1

</llo_original>
